<compile_context>
chip_gen: v6e
topology: v6e:2x2x1
jax: 0.10.0
libtpu: 0.0.40
codegen_flags: <defaults>
</compile_context>

<pallas_src>
import functools

import jax
import jax.numpy as jnp
from jax import lax
from jax.experimental import pallas as pl
from jax.experimental.pallas import tpu as pltpu

NUM_CLASSES = 5
BASE_ALPHA = 15.0
STRICT_ALPHA = 30.0
MARGIN = 0.05
DENSITY_THRESHOLD = 0.1
LABEL_SMOOTHING = 0.1
# Deterministic "buffer" init (matches nn.Module default class_weights_raw).
CLASS_WEIGHTS = jnp.array([1.5, 1.0, 1.2, 1.5, 1.0], dtype=jnp.float32)

_STAT_LANES = 128              # lane-dense output slab (unmasked stores)
_MAX_N_TILE = 32 * 1024        # lanes per N-tile; ~6 MiB dbl-buffered inputs + ~10 MiB temps
_SMALL_LANES = 16 * 1024       # fold the whole problem into one grid step when B*N <= this
_VMEM_LIMIT = 32 * 1024 * 1024


def _plan(B, N):
    """Return (BB, tn, splits, tiles_per_split, total_tiles)."""
    if B * N <= _SMALL_LANES:
        # Small path: one grid step, all batches in one block (last dim == full N, any N ok).
        return B, N, 1, 1, 1
    if N < 256:
        # Tiny per-sample N but many batches: full-N blocks, grid over B.
        return 1, N, 1, 1, 1
    tn = min(_MAX_N_TILE, (N // 128) * 128)      # multiple of 128, <= N
    total_tiles = -(-N // tn)
    splits = 1
    if B == 1 and total_tiles >= 4 and total_tiles % 2 == 0:
        splits = 2                               # use both TensorCores on v7x when B == 1
    tiles_per_split = total_tiles // splits
    return 1, tn, splits, tiles_per_split, total_tiles


def _fused_stats_kernel(logits_ref, lab_ref, z_ref, stat_ref, *,
                        n_total, tn, tiles_per_split):
    """Per-(split, batch, N-tile) partial sums; class on sublanes, metric on lanes."""
    t = pl.program_id(2)
    gt = pl.program_id(0) * tiles_per_split + t          # global N-tile index
    BB, C, TN = logits_ref.shape

    lane = lax.broadcasted_iota(jnp.int32, (1, TN), 1)
    n_valid = n_total - gt * tn                          # lanes beyond this are tail padding
    valid = lane < n_valid                               # (1, TN)
    lane_s = lax.broadcasted_iota(jnp.int32, (C, _STAT_LANES), 1)

    for b in range(BB):                                  # BB is small & static
        o = logits_ref[b].astype(jnp.float32)            # (C, TN), in-kernel upcast (bf16 ok)
        o = jnp.where(valid, o, 0.0)                     # mask before any arithmetic
        labels = jnp.where(valid, lab_ref[b].astype(jnp.int32), -1)   # (1, TN)
        z = jnp.where(valid, z_ref[b].astype(jnp.float32), 0.0)       # (1, TN)

        cls_i = lax.broadcasted_iota(jnp.int32, (C, TN), 0)
        cls_f = cls_i.astype(jnp.float32)

        # One shared max-over-C for argmax and log-softmax.
        mx = jnp.max(o, axis=0, keepdims=True)           # (1, TN)
        # First-occurrence argmax (torch tie-break); masked lanes get "class C" (no class).
        pred_f = jnp.min(jnp.where(o == mx, cls_f, jnp.float32(C)), axis=0, keepdims=True)
        pred_f = jnp.where(valid, pred_f, jnp.float32(C))
        pred_oh = (pred_f == cls_f).astype(jnp.float32)   # (C, TN)
        lab_oh = (labels == cls_i).astype(jnp.float32)    # (C, TN); -1 never matches

        # -log_softmax = lse - o ; never materialize the full (C, TN) difference.
        lse = mx + jnp.log(jnp.sum(jnp.exp(o - mx), axis=0, keepdims=True))
        lse = jnp.where(valid, lse, 0.0)                  # (1, TN)
        # TODO(synk): on v7x, computing exp in bf16 would take the EUP off the critical path.

        pc = jnp.sum(pred_oh, axis=1, keepdims=True)              # count(pred == c)
        zs = jnp.sum(pred_oh * z, axis=1, keepdims=True)          # Σ z over pred == c
        lc = jnp.sum(lab_oh, axis=1, keepdims=True)               # count(label == c)
        av = (jnp.sum(lab_oh * lse, axis=1, keepdims=True)
              - jnp.sum(lab_oh * o, axis=1, keepdims=True))       # unweighted NLL partial
        bv = (jnp.sum(lse, axis=1, keepdims=True)
              - jnp.sum(o, axis=1, keepdims=True))                # unweighted smooth partial

        res = (jnp.where(lane_s == 0, pc, 0.0)
               + jnp.where(lane_s == 1, zs, 0.0)
               + jnp.where(lane_s == 2, lc, 0.0)
               + jnp.where(lane_s == 3, av, 0.0)
               + jnp.where(lane_s == 4, bv, 0.0))                 # (C, 128)

        # Output block is resident across the N-reduction axis: init, then accumulate.
        @pl.when(t == 0)
        def _init(res=res, b=b):
            stat_ref[0, b] = res

        @pl.when(t != 0)
        def _acc(res=res, b=b):
            stat_ref[0, b] = stat_ref[0, b] + res


def _run_fused_stats(outputs, labels3, z3):
    B, C, N = outputs.shape
    BB, tn, splits, T, total_tiles = _plan(B, N)
    grid = (splits, B // BB, T)

    def nmap(s, bb, t):
        # s*T + t <= total_tiles - 1 by construction (even split), so always in range.
        return (bb, 0, s * T + t)

    kernel = functools.partial(_fused_stats_kernel,
                               n_total=N, tn=tn, tiles_per_split=T)

    out = pl.pallas_call(
        kernel,
        out_shape=jax.ShapeDtypeStruct((splits, B, C, _STAT_LANES), jnp.float32),
        grid=grid,
        in_specs=[
            pl.BlockSpec((BB, C, tn), nmap),
            pl.BlockSpec((BB, 1, tn), nmap),
            pl.BlockSpec((BB, 1, tn), nmap),
        ],
        out_specs=pl.BlockSpec((1, BB, C, _STAT_LANES), lambda s, bb, t: (s, bb, 0, 0)),
        compiler_params=pltpu.CompilerParams(
            dimension_semantics=("parallel", "parallel", "arbitrary"),
            vmem_limit_bytes=_VMEM_LIMIT),
    )(outputs, labels3, z3)
    return jnp.sum(out, axis=0)          # (B, C, 128): sum the split partial slabs


def _finalize_loss(pred_counts, z_sums, label_counts, nll_c, smooth_c, N, C):
    """Tiny (B, C) hierarchy-weight bookkeeping + weighted label-smoothed CE combine."""
    B = pred_counts.shape[0]
    # z mean per predicted class (valid_count clamped to >=1, like torch .clamp(min=1)).
    zm = z_sums / jnp.maximum(pred_counts, 1.0)                          # (B, C)
    # exist_mask gating uses .any() over the batch, as in the torch code
    # (valid_flags are always True in the reference because of the pre-clamp).
    exist_any = jnp.any((label_counts / N) > DENSITY_THRESHOLD, axis=0)  # (C,)

    weights = jnp.tile(CLASS_WEIGHTS[None, :], (B, 1))                   # (B, C)

    def add_pair(w, cid, ocid, viol, alpha):
        gate = (exist_any[cid] & exist_any[ocid]).astype(jnp.float32)
        w = w.at[:, cid].add(gate * alpha * viol)
        w = w.at[:, ocid].add(gate * 0.5 * alpha * viol)
        return w

    relu = jax.nn.relu
    # cid=1: strict_below [2, 3], soft_below [4]
    weights = add_pair(weights, 1, 2, relu(MARGIN - (zm[:, 1] - zm[:, 2])), STRICT_ALPHA)
    weights = add_pair(weights, 1, 3, relu(MARGIN - (zm[:, 1] - zm[:, 3])), STRICT_ALPHA)
    weights = add_pair(weights, 1, 4, relu(0.5 * MARGIN - (zm[:, 1] - zm[:, 4])), BASE_ALPHA)
    # cid=2: strict_above [1], strict_below [3]
    weights = add_pair(weights, 2, 1, relu(MARGIN - (zm[:, 1] - zm[:, 2])), STRICT_ALPHA)
    weights = add_pair(weights, 2, 3, relu(MARGIN - (zm[:, 2] - zm[:, 3])), STRICT_ALPHA)
    # cid=3: strict_above [2], strict_below [4]
    weights = add_pair(weights, 3, 2, relu(MARGIN - (zm[:, 2] - zm[:, 3])), STRICT_ALPHA)
    weights = add_pair(weights, 3, 4, relu(MARGIN - (zm[:, 3] - zm[:, 4])), STRICT_ALPHA)
    # cid=4: strict_above [1, 2, 3]
    weights = add_pair(weights, 4, 1, relu(MARGIN - (zm[:, 1] - zm[:, 4])), STRICT_ALPHA)
    weights = add_pair(weights, 4, 2, relu(MARGIN - (zm[:, 2] - zm[:, 4])), STRICT_ALPHA)
    weights = add_pair(weights, 4, 3, relu(MARGIN - (zm[:, 3] - zm[:, 4])), STRICT_ALPHA)

    # isolated / low-density prediction boost
    non_bg_density = (N - pred_counts[:, 0]) / N
    low = (non_bg_density < 0.1)[:, None]
    bump = jnp.where(jnp.arange(C)[None, :] == 0, BASE_ALPHA * 0.8, BASE_ALPHA * 1.2)
    weights = weights + jnp.where(low, bump, 0.0)
    weights = jnp.clip(weights, 0.5, 5.0)

    # dynamic per-class weights from the whole-batch label bincount
    counts = jnp.maximum(jnp.sum(label_counts, axis=0), 1.0)             # (C,)
    dyn = 1.0 / jnp.sqrt(counts)
    dyn = dyn.at[1].multiply(2.0).at[4].multiply(2.0)

    w_ce = jnp.mean(weights, axis=0) * dyn                               # (C,)

    # F.cross_entropy(weight=w_ce, label_smoothing=eps, reduction='mean'):
    #   (1-eps) * Σ w[t]·(-lp[t]) / Σ w[t]  +  (eps/C) * Σ_{c,n} w[c]·(-lp[c,n]) / Σ w[t]
    nll_total = jnp.sum(nll_c * w_ce[None, :])
    smooth_total = jnp.sum(smooth_c * w_ce[None, :])
    wsum_total = jnp.sum(label_counts * w_ce[None, :])
    loss = ((1.0 - LABEL_SMOOTHING) * nll_total
            + (LABEL_SMOOTHING / C) * smooth_total) / wsum_total
    return loss


def bridge_structure_loss(outputs, labels, points):
    """outputs: (B, C, N) logits; labels: (B, N) int; points: (B, N, 3).

    Dtypes are passed through as-is (bf16 logits / int8 labels / bf16 z all supported —
    the upcast happens in-kernel after the DMA, so narrower inputs halve HBM traffic).
    """
    B, C, N = outputs.shape
    labels3 = labels.reshape(B, 1, N)
    # TODO(synk): the points[..., 2] slice materializes a (B, N) copy; pass points as
    # (B, 3, N) upstream (contiguous z row) or fuse via allow_input_fusion to avoid it.
    z3 = points[..., 2].reshape(B, 1, N)

    stats = _run_fused_stats(outputs, labels3, z3)     # (B, C, 128)
    pred_counts = stats[:, :, 0]       # (B, C)  count(pred == c)   [f32, exact to 2^24]
    z_sums = stats[:, :, 1]            # (B, C)  Σ z over pred == c
    label_counts = stats[:, :, 2]      # (B, C)  count(label == c)
    nll_c = stats[:, :, 3]             # (B, C)  unweighted NLL partials
    smooth_c = stats[:, :, 4]          # (B, C)  unweighted smooth partials
    return _finalize_loss(pred_counts, z_sums, label_counts, nll_c, smooth_c, N, C)


def _reference_loss(outputs, labels, points):
    """Pure-JAX reference (no Pallas) used only as a numerical cross-check."""
    B, C, N = outputs.shape
    o = outputs.astype(jnp.float32)
    z = points[..., 2].astype(jnp.float32)[:, None, :]                   # (B, 1, N)
    lse = jax.scipy.special.logsumexp(o, axis=1, keepdims=True)          # (B, 1, N)
    nl = lse - o                                                         # (B, C, N)
    oh_p = jax.nn.one_hot(jnp.argmax(o, axis=1), C, axis=1, dtype=jnp.float32)
    oh_l = jax.nn.one_hot(labels.astype(jnp.int32), C, axis=1, dtype=jnp.float32)
    pred_counts = oh_p.sum(-1)
    z_sums = (oh_p * z).sum(-1)
    label_counts = oh_l.sum(-1)
    nll_c = (oh_l * nl).sum(-1)
    smooth_c = nl.sum(-1)
    return _finalize_loss(pred_counts, z_sums, label_counts, nll_c, smooth_c, N, C)


if __name__ == "__main__":
    key = jax.random.PRNGKey(0)
    C = NUM_CLASSES

    def make(bkey, B, N):
        k1, k2, k3 = jax.random.split(bkey, 3)
        outputs = jax.random.normal(k1, (B, C, N), dtype=jnp.float32)
        labels = jax.random.randint(k2, (B, N), 0, C, dtype=jnp.int32)
        points = jax.random.uniform(k3, (B, N, 3), dtype=jnp.float32)
        return outputs, labels, points

    loss_fn = jax.jit(bridge_structure_loss)
    ref_fn = jax.jit(_reference_loss)

    k0, k1, k2 = jax.random.split(key, 3)

    # Primary small shape (single-grid-step path): B=2, 5 classes, 1024 points.
    o, l, p = make(k0, 2, 1024)
    loss = loss_fn(o, l, p)
    jax.block_until_ready(loss)
    assert jnp.isfinite(loss), "loss is not finite"
    ref = ref_fn(o, l, p)
    assert jnp.allclose(loss, ref, rtol=2e-3, atol=1e-4), (loss, ref)

    # Awkward N (not a multiple of 128): exercises the tiled + lane-masked path.
    o, l, p = make(k1, 2, 17000)
    loss = loss_fn(o, l, p)
    ref = ref_fn(o, l, p)
    assert jnp.allclose(loss, ref, rtol=2e-3, atol=1e-4), (loss, ref)

    # B=1, multi-tile N reduction with the 2-way split (both-TensorCore) path.
    o, l, p = make(k2, 1, 4 * _MAX_N_TILE)
    loss = loss_fn(o, l, p)
    ref = ref_fn(o, l, p)
    assert jnp.allclose(loss, ref, rtol=2e-3, atol=1e-4), (loss, ref)

    print("KERNEL_OK")
</pallas_src>

<mosaic_0001>
module attributes {stable_mosaic.version = 11 : i64} {
  func.func @_fused_stats_kernel(%arg0: i32, %arg1: i32, %arg2: i32, %arg3: memref<2x5x1024xf32, #tpu.memory_space<vmem>>, %arg4: memref<2x1x1024xi32, #tpu.memory_space<vmem>>, %arg5: memref<2x1x1024xf32, #tpu.memory_space<vmem>>, %arg6: memref<1x2x5x128xf32, #tpu.memory_space<vmem>>) attributes {dimension_semantics = [#tpu.dimension_semantics<parallel>, #tpu.dimension_semantics<parallel>, #tpu.dimension_semantics<arbitrary>], iteration_bounds = array<i64: 1, 1, 1>, scalar_prefetch = 0 : i64, scratch_operands = 0 : i64, tpu.core_type = #tpu.core_type<tc>, window_params = [{transform_indices = @transform_0, window_bounds = array<i64: 2, 5, 1024>}, {transform_indices = @transform_1, window_bounds = array<i64: 2, 1, 1024>}, {transform_indices = @transform_2, window_bounds = array<i64: 2, 1, 1024>}, {transform_indices = @transform_3, window_bounds = array<i64: 1, 2, 5, 128>}]} {
    %c1_i32 = arith.constant 1 : i32
    %0 = arith.muli %arg0, %c1_i32 : i32
    %1 = arith.addi %0, %arg2 : i32
    %2 = tpu.iota {dimensions = array<i32: 1>} : vector<1x1024xi32>
    %c1024_i32 = arith.constant 1024 : i32
    %3 = arith.muli %1, %c1024_i32 : i32
    %c1024_i32_0 = arith.constant 1024 : i32
    %4 = arith.subi %c1024_i32_0, %3 : i32
    %5 = vector.broadcast %4 : i32 to vector<1x1024xi32>
    %6 = arith.cmpi slt, %2, %5 : vector<1x1024xi32>
    %7 = tpu.iota {dimensions = array<i32: 1>} : vector<5x128xi32>
    %c0 = arith.constant 0 : index
    %c0_1 = arith.constant 0 : index
    %c0_2 = arith.constant 0 : index
    %8 = vector.load %arg3[%c0, %c0_1, %c0_2] : memref<2x5x1024xf32, #tpu.memory_space<vmem>>, vector<1x5x1024xf32>
    %9 = vector.shape_cast %8 : vector<1x5x1024xf32> to vector<5x1024xf32>
    %cst = arith.constant 0.000000e+00 : f32
    %10 = vector.shape_cast %6 : vector<1x1024xi1> to vector<1x1024xi1>
    %11 = vector.broadcast %10 : vector<1x1024xi1> to vector<5x1024xi1>
    %12 = vector.broadcast %cst : f32 to vector<5x1024xf32>
    %13 = arith.select %11, %9, %12 : vector<5x1024xi1>, vector<5x1024xf32>
    %c0_3 = arith.constant 0 : index
    %c0_4 = arith.constant 0 : index
    %c0_5 = arith.constant 0 : index
    %14 = vector.load %arg4[%c0_3, %c0_4, %c0_5] : memref<2x1x1024xi32, #tpu.memory_space<vmem>>, vector<1x1x1024xi32>
    %15 = vector.shape_cast %14 : vector<1x1x1024xi32> to vector<1x1024xi32>
    %c-1_i32 = arith.constant -1 : i32
    %16 = vector.broadcast %c-1_i32 : i32 to vector<1x1024xi32>
    %17 = arith.select %6, %15, %16 : vector<1x1024xi1>, vector<1x1024xi32>
    %c0_6 = arith.constant 0 : index
    %c0_7 = arith.constant 0 : index
    %c0_8 = arith.constant 0 : index
    %18 = vector.load %arg5[%c0_6, %c0_7, %c0_8] : memref<2x1x1024xf32, #tpu.memory_space<vmem>>, vector<1x1x1024xf32>
    %19 = vector.shape_cast %18 : vector<1x1x1024xf32> to vector<1x1024xf32>
    %cst_9 = arith.constant 0.000000e+00 : f32
    %20 = vector.broadcast %cst_9 : f32 to vector<1x1024xf32>
    %21 = arith.select %6, %19, %20 : vector<1x1024xi1>, vector<1x1024xf32>
    %22 = tpu.iota {dimensions = array<i32: 0>} : vector<5x1024xi32>
    %23 = arith.sitofp %22 : vector<5x1024xi32> to vector<5x1024xf32>
    %cst_10 = arith.constant dense<0xFF800000> : vector<1024xf32>
    %24 = vector.multi_reduction <maximumf>, %13, %cst_10 [0] : vector<5x1024xf32> to vector<1024xf32>
    %25 = vector.shape_cast %24 : vector<1024xf32> to vector<1x1024xf32>
    %26 = vector.broadcast %25 : vector<1x1024xf32> to vector<5x1024xf32>
    %27 = arith.cmpf oeq, %13, %26 : vector<5x1024xf32>
    %cst_11 = arith.constant 5.000000e+00 : f32
    %28 = vector.broadcast %cst_11 : f32 to vector<5x1024xf32>
    %29 = arith.select %27, %23, %28 : vector<5x1024xi1>, vector<5x1024xf32>
    %cst_12 = arith.constant dense<0x7F800000> : vector<1024xf32>
    %30 = vector.multi_reduction <minimumf>, %29, %cst_12 [0] : vector<5x1024xf32> to vector<1024xf32>
    %31 = vector.shape_cast %30 : vector<1024xf32> to vector<1x1024xf32>
    %cst_13 = arith.constant 5.000000e+00 : f32
    %32 = vector.broadcast %cst_13 : f32 to vector<1x1024xf32>
    %33 = arith.select %6, %31, %32 : vector<1x1024xi1>, vector<1x1024xf32>
    %34 = vector.broadcast %33 : vector<1x1024xf32> to vector<5x1024xf32>
    %35 = arith.cmpf oeq, %34, %23 : vector<5x1024xf32>
    %36 = arith.extui %35 : vector<5x1024xi1> to vector<5x1024xi32>
    %37 = arith.sitofp %36 : vector<5x1024xi32> to vector<5x1024xf32>
    %38 = vector.broadcast %17 : vector<1x1024xi32> to vector<5x1024xi32>
    %39 = arith.cmpi eq, %38, %22 : vector<5x1024xi32>
    %40 = arith.extui %39 : vector<5x1024xi1> to vector<5x1024xi32>
    %41 = arith.sitofp %40 : vector<5x1024xi32> to vector<5x1024xf32>
    %42 = vector.broadcast %25 : vector<1x1024xf32> to vector<5x1024xf32>
    %43 = arith.subf %13, %42 : vector<5x1024xf32>
    %44 = math.exp %43 : vector<5x1024xf32>
    %cst_14 = arith.constant dense<0.000000e+00> : vector<1024xf32>
    %45 = vector.multi_reduction <add>, %44, %cst_14 [0] : vector<5x1024xf32> to vector<1024xf32>
    %46 = vector.shape_cast %45 : vector<1024xf32> to vector<1x1024xf32>
    %47 = math.log %46 : vector<1x1024xf32>
    %48 = arith.addf %25, %47 : vector<1x1024xf32>
    %cst_15 = arith.constant 0.000000e+00 : f32
    %49 = vector.broadcast %cst_15 : f32 to vector<1x1024xf32>
    %50 = arith.select %6, %48, %49 : vector<1x1024xi1>, vector<1x1024xf32>
    %cst_16 = arith.constant dense<0.000000e+00> : vector<5xf32>
    %51 = vector.multi_reduction <add>, %37, %cst_16 [1] : vector<5x1024xf32> to vector<5xf32>
    %52 = vector.shape_cast %51 : vector<5xf32> to vector<5x1xf32>
    %53 = vector.broadcast %21 : vector<1x1024xf32> to vector<5x1024xf32>
    %54 = arith.mulf %37, %53 : vector<5x1024xf32>
    %cst_17 = arith.constant dense<0.000000e+00> : vector<5xf32>
    %55 = vector.multi_reduction <add>, %54, %cst_17 [1] : vector<5x1024xf32> to vector<5xf32>
    %56 = vector.shape_cast %55 : vector<5xf32> to vector<5x1xf32>
    %cst_18 = arith.constant dense<0.000000e+00> : vector<5xf32>
    %57 = vector.multi_reduction <add>, %41, %cst_18 [1] : vector<5x1024xf32> to vector<5xf32>
    %58 = vector.shape_cast %57 : vector<5xf32> to vector<5x1xf32>
    %59 = vector.broadcast %50 : vector<1x1024xf32> to vector<5x1024xf32>
    %60 = arith.mulf %41, %59 : vector<5x1024xf32>
    %cst_19 = arith.constant dense<0.000000e+00> : vector<5xf32>
    %61 = vector.multi_reduction <add>, %60, %cst_19 [1] : vector<5x1024xf32> to vector<5xf32>
    %62 = vector.shape_cast %61 : vector<5xf32> to vector<5x1xf32>
    %63 = arith.mulf %41, %13 : vector<5x1024xf32>
    %cst_20 = arith.constant dense<0.000000e+00> : vector<5xf32>
    %64 = vector.multi_reduction <add>, %63, %cst_20 [1] : vector<5x1024xf32> to vector<5xf32>
    %65 = vector.shape_cast %64 : vector<5xf32> to vector<5x1xf32>
    %66 = arith.subf %62, %65 : vector<5x1xf32>
    %cst_21 = arith.constant dense<0.000000e+00> : vector<1xf32>
    %67 = vector.multi_reduction <add>, %50, %cst_21 [1] : vector<1x1024xf32> to vector<1xf32>
    %68 = vector.shape_cast %67 : vector<1xf32> to vector<1x1xf32>
    %cst_22 = arith.constant dense<0.000000e+00> : vector<5xf32>
    %69 = vector.multi_reduction <add>, %13, %cst_22 [1] : vector<5x1024xf32> to vector<5xf32>
    %70 = vector.shape_cast %69 : vector<5xf32> to vector<5x1xf32>
    %71 = vector.broadcast %68 : vector<1x1xf32> to vector<5x1xf32>
    %72 = arith.subf %71, %70 : vector<5x1xf32>
    %c0_i32 = arith.constant 0 : i32
    %73 = vector.broadcast %c0_i32 : i32 to vector<5x128xi32>
    %74 = arith.cmpi eq, %7, %73 : vector<5x128xi32>
    %cst_23 = arith.constant 0.000000e+00 : f32
    %75 = vector.shape_cast %52 : vector<5x1xf32> to vector<5x1xf32>
    %76 = vector.broadcast %75 : vector<5x1xf32> to vector<5x128xf32>
    %77 = vector.broadcast %cst_23 : f32 to vector<5x128xf32>
    %78 = arith.select %74, %76, %77 : vector<5x128xi1>, vector<5x128xf32>
    %c1_i32_24 = arith.constant 1 : i32
    %79 = vector.broadcast %c1_i32_24 : i32 to vector<5x128xi32>
    %80 = arith.cmpi eq, %7, %79 : vector<5x128xi32>
    %cst_25 = arith.constant 0.000000e+00 : f32
    %81 = vector.shape_cast %56 : vector<5x1xf32> to vector<5x1xf32>
    %82 = vector.broadcast %81 : vector<5x1xf32> to vector<5x128xf32>
    %83 = vector.broadcast %cst_25 : f32 to vector<5x128xf32>
    %84 = arith.select %80, %82, %83 : vector<5x128xi1>, vector<5x128xf32>
    %85 = arith.addf %78, %84 : vector<5x128xf32>
    %c2_i32 = arith.constant 2 : i32
    %86 = vector.broadcast %c2_i32 : i32 to vector<5x128xi32>
    %87 = arith.cmpi eq, %7, %86 : vector<5x128xi32>
    %cst_26 = arith.constant 0.000000e+00 : f32
    %88 = vector.shape_cast %58 : vector<5x1xf32> to vector<5x1xf32>
    %89 = vector.broadcast %88 : vector<5x1xf32> to vector<5x128xf32>
    %90 = vector.broadcast %cst_26 : f32 to vector<5x128xf32>
    %91 = arith.select %87, %89, %90 : vector<5x128xi1>, vector<5x128xf32>
    %92 = arith.addf %85, %91 : vector<5x128xf32>
    %c3_i32 = arith.constant 3 : i32
    %93 = vector.broadcast %c3_i32 : i32 to vector<5x128xi32>
    %94 = arith.cmpi eq, %7, %93 : vector<5x128xi32>
    %cst_27 = arith.constant 0.000000e+00 : f32
    %95 = vector.shape_cast %66 : vector<5x1xf32> to vector<5x1xf32>
    %96 = vector.broadcast %95 : vector<5x1xf32> to vector<5x128xf32>
    %97 = vector.broadcast %cst_27 : f32 to vector<5x128xf32>
    %98 = arith.select %94, %96, %97 : vector<5x128xi1>, vector<5x128xf32>
    %99 = arith.addf %92, %98 : vector<5x128xf32>
    %c4_i32 = arith.constant 4 : i32
    %100 = vector.broadcast %c4_i32 : i32 to vector<5x128xi32>
    %101 = arith.cmpi eq, %7, %100 : vector<5x128xi32>
    %cst_28 = arith.constant 0.000000e+00 : f32
    %102 = vector.shape_cast %72 : vector<5x1xf32> to vector<5x1xf32>
    %103 = vector.broadcast %102 : vector<5x1xf32> to vector<5x128xf32>
    %104 = vector.broadcast %cst_28 : f32 to vector<5x128xf32>
    %105 = arith.select %101, %103, %104 : vector<5x128xi1>, vector<5x128xf32>
    %106 = arith.addf %99, %105 : vector<5x128xf32>
    %c0_i32_29 = arith.constant 0 : i32
    %107 = arith.cmpi eq, %arg2, %c0_i32_29 : i32
    %108 = arith.extui %107 : i1 to i32
    %c0_i32_30 = arith.constant 0 : i32
    %109 = arith.cmpi ne, %108, %c0_i32_30 : i32
    scf.if %109 {
      %c0_71 = arith.constant 0 : index
      %c0_72 = arith.constant 0 : index
      %c0_73 = arith.constant 0 : index
      %c0_74 = arith.constant 0 : index
      %218 = vector.load %arg6[%c0_71, %c0_72, %c0_73, %c0_74] : memref<1x2x5x128xf32, #tpu.memory_space<vmem>>, vector<1x1x5x128xf32>
      %219 = vector.shape_cast %218 : vector<1x1x5x128xf32> to vector<5x128xf32>
      %220 = vector.shape_cast %106 : vector<5x128xf32> to vector<1x1x5x128xf32>
      tpu.vector_store %arg6[%c0_71, %c0_72, %c0_73, %c0_74], %220 {strides = array<i32>} : memref<1x2x5x128xf32, #tpu.memory_space<vmem>>, vector<1x1x5x128xf32>,
    } else {
    }
    %c0_i32_31 = arith.constant 0 : i32
    %110 = arith.cmpi ne, %arg2, %c0_i32_31 : i32
    %111 = arith.extui %110 : i1 to i32
    %c0_i32_32 = arith.constant 0 : i32
    %112 = arith.cmpi ne, %111, %c0_i32_32 : i32
    scf.if %112 {
      %c0_71 = arith.constant 0 : index
      %c0_72 = arith.constant 0 : index
      %c0_73 = arith.constant 0 : index
      %c0_74 = arith.constant 0 : index
      %218 = vector.load %arg6[%c0_71, %c0_72, %c0_73, %c0_74] : memref<1x2x5x128xf32, #tpu.memory_space<vmem>>, vector<1x1x5x128xf32>
      %219 = vector.shape_cast %218 : vector<1x1x5x128xf32> to vector<5x128xf32>
      %220 = arith.addf %219, %106 : vector<5x128xf32>
      %c0_75 = arith.constant 0 : index
      %c0_76 = arith.constant 0 : index
      %c0_77 = arith.constant 0 : index
      %c0_78 = arith.constant 0 : index
      %221 = vector.load %arg6[%c0_75, %c0_76, %c0_77, %c0_78] : memref<1x2x5x128xf32, #tpu.memory_space<vmem>>, vector<1x1x5x128xf32>
      %222 = vector.shape_cast %221 : vector<1x1x5x128xf32> to vector<5x128xf32>
      %223 = vector.shape_cast %220 : vector<5x128xf32> to vector<1x1x5x128xf32>
      tpu.vector_store %arg6[%c0_75, %c0_76, %c0_77, %c0_78], %223 {strides = array<i32>} : memref<1x2x5x128xf32, #tpu.memory_space<vmem>>, vector<1x1x5x128xf32>,
    } else {
    }
    %c1 = arith.constant 1 : index
    %c0_33 = arith.constant 0 : index
    %c0_34 = arith.constant 0 : index
    %113 = vector.load %arg3[%c1, %c0_33, %c0_34] : memref<2x5x1024xf32, #tpu.memory_space<vmem>>, vector<1x5x1024xf32>
    %114 = vector.shape_cast %113 : vector<1x5x1024xf32> to vector<5x1024xf32>
    %cst_35 = arith.constant 0.000000e+00 : f32
    %115 = vector.shape_cast %6 : vector<1x1024xi1> to vector<1x1024xi1>
    %116 = vector.broadcast %115 : vector<1x1024xi1> to vector<5x1024xi1>
    %117 = vector.broadcast %cst_35 : f32 to vector<5x1024xf32>
    %118 = arith.select %116, %114, %117 : vector<5x1024xi1>, vector<5x1024xf32>
    %c1_36 = arith.constant 1 : index
    %c0_37 = arith.constant 0 : index
    %c0_38 = arith.constant 0 : index
    %119 = vector.load %arg4[%c1_36, %c0_37, %c0_38] : memref<2x1x1024xi32, #tpu.memory_space<vmem>>, vector<1x1x1024xi32>
    %120 = vector.shape_cast %119 : vector<1x1x1024xi32> to vector<1x1024xi32>
    %c-1_i32_39 = arith.constant -1 : i32
    %121 = vector.broadcast %c-1_i32_39 : i32 to vector<1x1024xi32>
    %122 = arith.select %6, %120, %121 : vector<1x1024xi1>, vector<1x1024xi32>
    %c1_40 = arith.constant 1 : index
    %c0_41 = arith.constant 0 : index
    %c0_42 = arith.constant 0 : index
    %123 = vector.load %arg5[%c1_40, %c0_41, %c0_42] : memref<2x1x1024xf32, #tpu.memory_space<vmem>>, vector<1x1x1024xf32>
    %124 = vector.shape_cast %123 : vector<1x1x1024xf32> to vector<1x1024xf32>
    %cst_43 = arith.constant 0.000000e+00 : f32
    %125 = vector.broadcast %cst_43 : f32 to vector<1x1024xf32>
    %126 = arith.select %6, %124, %125 : vector<1x1024xi1>, vector<1x1024xf32>
    %127 = tpu.iota {dimensions = array<i32: 0>} : vector<5x1024xi32>
    %128 = arith.sitofp %127 : vector<5x1024xi32> to vector<5x1024xf32>
    %cst_44 = arith.constant dense<0xFF800000> : vector<1024xf32>
    %129 = vector.multi_reduction <maximumf>, %118, %cst_44 [0] : vector<5x1024xf32> to vector<1024xf32>
    %130 = vector.shape_cast %129 : vector<1024xf32> to vector<1x1024xf32>
    %131 = vector.broadcast %130 : vector<1x1024xf32> to vector<5x1024xf32>
    %132 = arith.cmpf oeq, %118, %131 : vector<5x1024xf32>
    %cst_45 = arith.constant 5.000000e+00 : f32
    %133 = vector.broadcast %cst_45 : f32 to vector<5x1024xf32>
    %134 = arith.select %132, %128, %133 : vector<5x1024xi1>, vector<5x1024xf32>
    %cst_46 = arith.constant dense<0x7F800000> : vector<1024xf32>
    %135 = vector.multi_reduction <minimumf>, %134, %cst_46 [0] : vector<5x1024xf32> to vector<1024xf32>
    %136 = vector.shape_cast %135 : vector<1024xf32> to vector<1x1024xf32>
    %cst_47 = arith.constant 5.000000e+00 : f32
    %137 = vector.broadcast %cst_47 : f32 to vector<1x1024xf32>
    %138 = arith.select %6, %136, %137 : vector<1x1024xi1>, vector<1x1024xf32>
    %139 = vector.broadcast %138 : vector<1x1024xf32> to vector<5x1024xf32>
    %140 = arith.cmpf oeq, %139, %128 : vector<5x1024xf32>
    %141 = arith.extui %140 : vector<5x1024xi1> to vector<5x1024xi32>
    %142 = arith.sitofp %141 : vector<5x1024xi32> to vector<5x1024xf32>
    %143 = vector.broadcast %122 : vector<1x1024xi32> to vector<5x1024xi32>
    %144 = arith.cmpi eq, %143, %127 : vector<5x1024xi32>
    %145 = arith.extui %144 : vector<5x1024xi1> to vector<5x1024xi32>
    %146 = arith.sitofp %145 : vector<5x1024xi32> to vector<5x1024xf32>
    %147 = vector.broadcast %130 : vector<1x1024xf32> to vector<5x1024xf32>
    %148 = arith.subf %118, %147 : vector<5x1024xf32>
    %149 = math.exp %148 : vector<5x1024xf32>
    %cst_48 = arith.constant dense<0.000000e+00> : vector<1024xf32>
    %150 = vector.multi_reduction <add>, %149, %cst_48 [0] : vector<5x1024xf32> to vector<1024xf32>
    %151 = vector.shape_cast %150 : vector<1024xf32> to vector<1x1024xf32>
    %152 = math.log %151 : vector<1x1024xf32>
    %153 = arith.addf %130, %152 : vector<1x1024xf32>
    %cst_49 = arith.constant 0.000000e+00 : f32
    %154 = vector.broadcast %cst_49 : f32 to vector<1x1024xf32>
    %155 = arith.select %6, %153, %154 : vector<1x1024xi1>, vector<1x1024xf32>
    %cst_50 = arith.constant dense<0.000000e+00> : vector<5xf32>
    %156 = vector.multi_reduction <add>, %142, %cst_50 [1] : vector<5x1024xf32> to vector<5xf32>
    %157 = vector.shape_cast %156 : vector<5xf32> to vector<5x1xf32>
    %158 = vector.broadcast %126 : vector<1x1024xf32> to vector<5x1024xf32>
    %159 = arith.mulf %142, %158 : vector<5x1024xf32>
    %cst_51 = arith.constant dense<0.000000e+00> : vector<5xf32>
    %160 = vector.multi_reduction <add>, %159, %cst_51 [1] : vector<5x1024xf32> to vector<5xf32>
    %161 = vector.shape_cast %160 : vector<5xf32> to vector<5x1xf32>
    %cst_52 = arith.constant dense<0.000000e+00> : vector<5xf32>
    %162 = vector.multi_reduction <add>, %146, %cst_52 [1] : vector<5x1024xf32> to vector<5xf32>
    %163 = vector.shape_cast %162 : vector<5xf32> to vector<5x1xf32>
    %164 = vector.broadcast %155 : vector<1x1024xf32> to vector<5x1024xf32>
    %165 = arith.mulf %146, %164 : vector<5x1024xf32>
    %cst_53 = arith.constant dense<0.000000e+00> : vector<5xf32>
    %166 = vector.multi_reduction <add>, %165, %cst_53 [1] : vector<5x1024xf32> to vector<5xf32>
    %167 = vector.shape_cast %166 : vector<5xf32> to vector<5x1xf32>
    %168 = arith.mulf %146, %118 : vector<5x1024xf32>
    %cst_54 = arith.constant dense<0.000000e+00> : vector<5xf32>
    %169 = vector.multi_reduction <add>, %168, %cst_54 [1] : vector<5x1024xf32> to vector<5xf32>
    %170 = vector.shape_cast %169 : vector<5xf32> to vector<5x1xf32>
    %171 = arith.subf %167, %170 : vector<5x1xf32>
    %cst_55 = arith.constant dense<0.000000e+00> : vector<1xf32>
    %172 = vector.multi_reduction <add>, %155, %cst_55 [1] : vector<1x1024xf32> to vector<1xf32>
    %173 = vector.shape_cast %172 : vector<1xf32> to vector<1x1xf32>
    %cst_56 = arith.constant dense<0.000000e+00> : vector<5xf32>
    %174 = vector.multi_reduction <add>, %118, %cst_56 [1] : vector<5x1024xf32> to vector<5xf32>
    %175 = vector.shape_cast %174 : vector<5xf32> to vector<5x1xf32>
    %176 = vector.broadcast %173 : vector<1x1xf32> to vector<5x1xf32>
    %177 = arith.subf %176, %175 : vector<5x1xf32>
    %c0_i32_57 = arith.constant 0 : i32
    %178 = vector.broadcast %c0_i32_57 : i32 to vector<5x128xi32>
    %179 = arith.cmpi eq, %7, %178 : vector<5x128xi32>
    %cst_58 = arith.constant 0.000000e+00 : f32
    %180 = vector.shape_cast %157 : vector<5x1xf32> to vector<5x1xf32>
    %181 = vector.broadcast %180 : vector<5x1xf32> to vector<5x128xf32>
    %182 = vector.broadcast %cst_58 : f32 to vector<5x128xf32>
    %183 = arith.select %179, %181, %182 : vector<5x128xi1>, vector<5x128xf32>
    %c1_i32_59 = arith.constant 1 : i32
    %184 = vector.broadcast %c1_i32_59 : i32 to vector<5x128xi32>
    %185 = arith.cmpi eq, %7, %184 : vector<5x128xi32>
    %cst_60 = arith.constant 0.000000e+00 : f32
    %186 = vector.shape_cast %161 : vector<5x1xf32> to vector<5x1xf32>
    %187 = vector.broadcast %186 : vector<5x1xf32> to vector<5x128xf32>
    %188 = vector.broadcast %cst_60 : f32 to vector<5x128xf32>
    %189 = arith.select %185, %187, %188 : vector<5x128xi1>, vector<5x128xf32>
    %190 = arith.addf %183, %189 : vector<5x128xf32>
    %c2_i32_61 = arith.constant 2 : i32
    %191 = vector.broadcast %c2_i32_61 : i32 to vector<5x128xi32>
    %192 = arith.cmpi eq, %7, %191 : vector<5x128xi32>
    %cst_62 = arith.constant 0.000000e+00 : f32
    %193 = vector.shape_cast %163 : vector<5x1xf32> to vector<5x1xf32>
    %194 = vector.broadcast %193 : vector<5x1xf32> to vector<5x128xf32>
    %195 = vector.broadcast %cst_62 : f32 to vector<5x128xf32>
    %196 = arith.select %192, %194, %195 : vector<5x128xi1>, vector<5x128xf32>
    %197 = arith.addf %190, %196 : vector<5x128xf32>
    %c3_i32_63 = arith.constant 3 : i32
    %198 = vector.broadcast %c3_i32_63 : i32 to vector<5x128xi32>
    %199 = arith.cmpi eq, %7, %198 : vector<5x128xi32>
    %cst_64 = arith.constant 0.000000e+00 : f32
    %200 = vector.shape_cast %171 : vector<5x1xf32> to vector<5x1xf32>
    %201 = vector.broadcast %200 : vector<5x1xf32> to vector<5x128xf32>
    %202 = vector.broadcast %cst_64 : f32 to vector<5x128xf32>
    %203 = arith.select %199, %201, %202 : vector<5x128xi1>, vector<5x128xf32>
    %204 = arith.addf %197, %203 : vector<5x128xf32>
    %c4_i32_65 = arith.constant 4 : i32
    %205 = vector.broadcast %c4_i32_65 : i32 to vector<5x128xi32>
    %206 = arith.cmpi eq, %7, %205 : vector<5x128xi32>
    %cst_66 = arith.constant 0.000000e+00 : f32
    %207 = vector.shape_cast %177 : vector<5x1xf32> to vector<5x1xf32>
    %208 = vector.broadcast %207 : vector<5x1xf32> to vector<5x128xf32>
    %209 = vector.broadcast %cst_66 : f32 to vector<5x128xf32>
    %210 = arith.select %206, %208, %209 : vector<5x128xi1>, vector<5x128xf32>
    %211 = arith.addf %204, %210 : vector<5x128xf32>
    %c0_i32_67 = arith.constant 0 : i32
    %212 = arith.cmpi eq, %arg2, %c0_i32_67 : i32
    %213 = arith.extui %212 : i1 to i32
    %c0_i32_68 = arith.constant 0 : i32
    %214 = arith.cmpi ne, %213, %c0_i32_68 : i32
    scf.if %214 {
      %c0_71 = arith.constant 0 : index
      %c1_72 = arith.constant 1 : index
      %c0_73 = arith.constant 0 : index
      %c0_74 = arith.constant 0 : index
      %218 = vector.load %arg6[%c0_71, %c1_72, %c0_73, %c0_74] : memref<1x2x5x128xf32, #tpu.memory_space<vmem>>, vector<1x1x5x128xf32>
      %219 = vector.shape_cast %218 : vector<1x1x5x128xf32> to vector<5x128xf32>
      %220 = vector.shape_cast %211 : vector<5x128xf32> to vector<1x1x5x128xf32>
      tpu.vector_store %arg6[%c0_71, %c1_72, %c0_73, %c0_74], %220 {strides = array<i32>} : memref<1x2x5x128xf32, #tpu.memory_space<vmem>>, vector<1x1x5x128xf32>,
    } else {
    }
    %c0_i32_69 = arith.constant 0 : i32
    %215 = arith.cmpi ne, %arg2, %c0_i32_69 : i32
    %216 = arith.extui %215 : i1 to i32
    %c0_i32_70 = arith.constant 0 : i32
    %217 = arith.cmpi ne, %216, %c0_i32_70 : i32
    scf.if %217 {
      %c0_71 = arith.constant 0 : index
      %c1_72 = arith.constant 1 : index
      %c0_73 = arith.constant 0 : index
      %c0_74 = arith.constant 0 : index
      %218 = vector.load %arg6[%c0_71, %c1_72, %c0_73, %c0_74] : memref<1x2x5x128xf32, #tpu.memory_space<vmem>>, vector<1x1x5x128xf32>
      %219 = vector.shape_cast %218 : vector<1x1x5x128xf32> to vector<5x128xf32>
      %220 = arith.addf %219, %211 : vector<5x128xf32>
      %c0_75 = arith.constant 0 : index
      %c1_76 = arith.constant 1 : index
      %c0_77 = arith.constant 0 : index
      %c0_78 = arith.constant 0 : index
      %221 = vector.load %arg6[%c0_75, %c1_76, %c0_77, %c0_78] : memref<1x2x5x128xf32, #tpu.memory_space<vmem>>, vector<1x1x5x128xf32>
      %222 = vector.shape_cast %221 : vector<1x1x5x128xf32> to vector<5x128xf32>
      %223 = vector.shape_cast %220 : vector<5x128xf32> to vector<1x1x5x128xf32>
      tpu.vector_store %arg6[%c0_75, %c1_76, %c0_77, %c0_78], %223 {strides = array<i32>} : memref<1x2x5x128xf32, #tpu.memory_space<vmem>>, vector<1x1x5x128xf32>,
    } else {
    }
    return
  }
  func.func @transform_0(%arg0: i32, %arg1: i32, %arg2: i32) -> (i32, i32, i32) {
    %c1_i32 = arith.constant 1 : i32
    %0 = arith.muli %arg0, %c1_i32 : i32
    %1 = arith.addi %0, %arg2 : i32
    %c0_i32 = arith.constant 0 : i32
    %c0_i32_0 = arith.constant 0 : i32
    return %arg1, %c0_i32, %1 : i32, i32, i32
  }
  func.func @transform_1(%arg0: i32, %arg1: i32, %arg2: i32) -> (i32, i32, i32) {
    %c1_i32 = arith.constant 1 : i32
    %0 = arith.muli %arg0, %c1_i32 : i32
    %1 = arith.addi %0, %arg2 : i32
    %c0_i32 = arith.constant 0 : i32
    %c0_i32_0 = arith.constant 0 : i32
    return %arg1, %c0_i32, %1 : i32, i32, i32
  }
  func.func @transform_2(%arg0: i32, %arg1: i32, %arg2: i32) -> (i32, i32, i32) {
    %c1_i32 = arith.constant 1 : i32
    %0 = arith.muli %arg0, %c1_i32 : i32
    %1 = arith.addi %0, %arg2 : i32
    %c0_i32 = arith.constant 0 : i32
    %c0_i32_0 = arith.constant 0 : i32
    return %arg1, %c0_i32, %1 : i32, i32, i32
  }
  func.func @transform_3(%arg0: i32, %arg1: i32, %arg2: i32) -> (i32, i32, i32, i32) {
    %c0_i32 = arith.constant 0 : i32
    %c0_i32_0 = arith.constant 0 : i32
    %c0_i32_1 = arith.constant 0 : i32
    return %arg0, %arg1, %c0_i32, %c0_i32_0 : i32, i32, i32, i32
  }
}

</mosaic_0001>

<llo_original>
// kernel: bridge_structure_loss.1
$region0: #{bridge_structure_loss.1}
  #allocation0 [shape = 'u32[]', space=smem, size = 0x4, offset = 0x4, fixed_abs, tag = 'smem constant byte address 0x4 - core index']
  #allocation1 [shape = 'u32[144,128]{1,0:T(1,128)}', space=vmem, size = 0x12000, scoped, tag = 'internal scratch']
  %s0 = inlined_call_operand.vmem [shape: f32[2,5,1024], index: 0, kind: input, shape index: {}]
  %s1 = inlined_call_operand.vmem [shape: s32[2,1,1024], index: 1, kind: input, shape index: {}]
  %s2 = inlined_call_operand.vmem [shape: f32[2,1,1024], index: 2, kind: input, shape index: {}]
  %s3 = inlined_call_operand.vmem [shape: f32[1,2,5,128], index: 3, kind: output, shape index: {}]
  %s4 = sld [smem:[#allocation0]]
  $region38: #{bridge_structure_loss.1} parent=0
    _
  %s6 = ssub.s32 1, %s4
  %s7 = scalar_select 0, %s6, %s4
  // Predicated region
  $region2: #{bridge_structure_loss.1} parent=0 // pred_check
    _
  $region3: #{bridge_structure_loss.1} parent=0 // pred_check_branch
    %9 = sbr.rel (0) target = $region5
  $region4: #{bridge_structure_loss.1} parent=0 // pred_region
    %s10 = sadd.s32 0, 0
    %s11 = smul.u32 8, %s10
    %p12 = scmp.lt.s32.totalorder %s11, 7
    %s13 = scalar_select %p12, %s11, 7
    %s14 = smul.addr %s13, 8
    %s15 = scalar_lea.vmem %s0, %s14
    %s16 = sadd.s32 0, 0
    %s17 = smul.u32 8, %s16
  $region5: #{bridge_structure_loss.1} parent=0 // pred_fallthru
    _
  // Predicated region
  $region6: #{bridge_structure_loss.1} parent=0 // pred_check
    _
  $region7: #{bridge_structure_loss.1} parent=0 // pred_check_branch
    %19 = sbr.rel (0) target = $region9
  $region8: #{bridge_structure_loss.1} parent=0 // pred_region
    %s20 = sadd.s32 0, 0
    %s21 = smul.u32 8, %s20
    %p22 = scmp.lt.s32.totalorder %s21, 7
    %s23 = scalar_select %p22, %s21, 7
    %s24 = scalar_lea.vmem %s1, %s23
    %s25 = sadd.s32 0, 0
    %s26 = smul.u32 8, %s25
  $region9: #{bridge_structure_loss.1} parent=0 // pred_fallthru
    _
  // Predicated region
  $region10: #{bridge_structure_loss.1} parent=0 // pred_check
    _
  $region11: #{bridge_structure_loss.1} parent=0 // pred_check_branch
    %28 = sbr.rel (0) target = $region13
  $region12: #{bridge_structure_loss.1} parent=0 // pred_region
    %s29 = sadd.s32 0, 0
    %s30 = smul.u32 8, %s29
    %p31 = scmp.lt.s32.totalorder %s30, 7
    %s32 = scalar_select %p31, %s30, 7
    %s33 = scalar_lea.vmem %s2, %s32
    %s34 = sadd.s32 0, 0
    %s35 = smul.u32 8, %s34
  $region13: #{bridge_structure_loss.1} parent=0 // pred_fallthru
    _
  %s36 = sadd.s32 0, 0
  %s37 = smul.u32 8, %s36
  %p38 = scmp.lt.s32.totalorder %s37, 7
  %s39 = scalar_select %p38, %s37, 7
  %s40 = smul.addr %s39, 8
  %s41 = scalar_lea.vmem %s0, %s40
  %s42 = sadd.s32 0, 0
  %s43 = smul.u32 8, %s42
  %p44 = scmp.lt.s32.totalorder %s43, 7
  %s45 = scalar_select %p44, %s43, 7
  %s46 = scalar_lea.vmem %s1, %s45
  %s47 = sadd.s32 0, 0
  %s48 = smul.u32 8, %s47
  %p49 = scmp.lt.s32.totalorder %s48, 7
  %s50 = scalar_select %p49, %s48, 7
  %s51 = scalar_lea.vmem %s2, %s50
  %s52 = sadd.s32 0, 0
  %s53 = smul.u32 8, %s52
  %p54 = scmp.lt.s32.totalorder %s53, 7
  %s55 = scalar_select %p54, %s53, 7
  %s56 = smul.addr %s55, 8
  %s57 = scalar_lea.vmem %s0, %s56
  %s58 = sadd.s32 0, 0
  %s59 = smul.u32 8, %s58
  %s60 = sadd.s32 0, 0
  %s61 = smul.u32 8, %s60
  %p62 = scmp.lt.s32.totalorder %s61, 7
  %s63 = scalar_select %p62, %s61, 7
  %s64 = scalar_lea.vmem %s1, %s63
  %s65 = sadd.s32 0, 0
  %s66 = smul.u32 8, %s65
  %s67 = sadd.s32 0, 0
  %s68 = smul.u32 8, %s67
  %p69 = scmp.lt.s32.totalorder %s68, 7
  %s70 = scalar_select %p69, %s68, 7
  %s71 = scalar_lea.vmem %s2, %s70
  %s72 = sadd.s32 0, 0
  %s73 = smul.u32 8, %s72
  %s74 = sadd.s32 0, 0
  %v75 = vlaneseq
  %v76 = vand.u32 %v75, 127
  %v77 = vadd.s32 %v76, 128
  %v78 = vadd.s32 %v76, 256
  %v79 = vadd.s32 %v76, 384
  %v80 = vadd.s32 %v76, 512
  %v81 = vadd.s32 %v76, 640
  %v82 = vadd.s32 %v76, 768
  %v83 = vadd.s32 %v76, 896
  %s84 = smul.u32 %s74, 1024
  %s85 = ssub.s32 1024, %s84
  %v86 = vstv %s85
  %vm87 = vcmp.lt.s32.totalorder %v76, %v86
  %vm88 = vcmp.lt.s32.totalorder %v77, %v86
  %vm89 = vcmp.lt.s32.totalorder %v78, %v86
  %vm90 = vcmp.lt.s32.totalorder %v79, %v86
  %vm91 = vcmp.lt.s32.totalorder %v80, %v86
  %vm92 = vcmp.lt.s32.totalorder %v81, %v86
  %vm93 = vcmp.lt.s32.totalorder %v82, %v86
  %vm94 = vcmp.lt.s32.totalorder %v83, %v86
  %v95 = vld [vmem:[%s57] sm:$0x1f]
  %v96 = vld [vmem:[%s57 + $0x8] sm:$0x1f]
  %v97 = vld [vmem:[%s57 + $0x10] sm:$0x1f]
  %v98 = vld [vmem:[%s57 + $0x18] sm:$0x1f]
  %v99 = vld [vmem:[%s57 + $0x20] sm:$0x1f]
  %v100 = vld [vmem:[%s57 + $0x28] sm:$0x1f]
  %v101 = vld [vmem:[%s57 + $0x30] sm:$0x1f]
  %v102 = vld [vmem:[%s57 + $0x38] sm:$0x1f]
  %v103 = vsel %vm87, 1, 0
  %v104 = vsel %vm88, 1, 0
  %v105 = vsel %vm89, 1, 0
  %v106 = vsel %vm90, 1, 0
  %v107 = vsel %vm91, 1, 0
  %v108 = vsel %vm92, 1, 0
  %v109 = vsel %vm93, 1, 0
  %v110 = vsel %vm94, 1, 0
  %vm111 = vcmp.eq.s32.totalorder %v103, 1
  %vm112 = vcmp.eq.s32.totalorder %v104, 1
  %vm113 = vcmp.eq.s32.totalorder %v105, 1
  %vm114 = vcmp.eq.s32.totalorder %v106, 1
  %vm115 = vcmp.eq.s32.totalorder %v107, 1
  %vm116 = vcmp.eq.s32.totalorder %v108, 1
  %vm117 = vcmp.eq.s32.totalorder %v109, 1
  %vm118 = vcmp.eq.s32.totalorder %v110, 1
  %v119 = vsel %vm111, %v95, 0.0
  %v120 = vsel %vm112, %v96, 0.0
  %v121 = vsel %vm113, %v97, 0.0
  %v122 = vsel %vm114, %v98, 0.0
  %v123 = vsel %vm115, %v99, 0.0
  %v124 = vsel %vm116, %v100, 0.0
  %v125 = vsel %vm117, %v101, 0.0
  %v126 = vsel %vm118, %v102, 0.0
  %v127 = vld [vmem:[%s64] sm:$0xff]
  %v128 = vlaneseq
  %v129 = vshrl.u32 %v128, 7
  %v130 = vsub.s32 0, %v129
  %v131 = vrot.slane %v127, %v130
  %v132 = vlaneseq
  %v133 = vshrl.u32 %v132, 7
  %v134 = vsub.s32 1, %v133
  %v135 = vrot.slane %v127, %v134
  %v136 = vlaneseq
  %v137 = vshrl.u32 %v136, 7
  %v138 = vsub.s32 2, %v137
  %v139 = vrot.slane %v127, %v138
  %v140 = vlaneseq
  %v141 = vshrl.u32 %v140, 7
  %v142 = vsub.s32 3, %v141
  %v143 = vrot.slane %v127, %v142
  %v144 = vlaneseq
  %v145 = vshrl.u32 %v144, 7
  %v146 = vsub.s32 4, %v145
  %v147 = vrot.slane %v127, %v146
  %v148 = vlaneseq
  %v149 = vshrl.u32 %v148, 7
  %v150 = vsub.s32 5, %v149
  %v151 = vrot.slane %v127, %v150
  %v152 = vlaneseq
  %v153 = vshrl.u32 %v152, 7
  %v154 = vsub.s32 6, %v153
  %v155 = vrot.slane %v127, %v154
  %v156 = vlaneseq
  %v157 = vshrl.u32 %v156, 7
  %v158 = vsub.s32 7, %v157
  %v159 = vrot.slane %v127, %v158
  %v160 = vsel %vm87, %v131, 4294967295
  %v161 = vsel %vm88, %v135, 4294967295
  %v162 = vsel %vm89, %v139, 4294967295
  %v163 = vsel %vm90, %v143, 4294967295
  %v164 = vsel %vm91, %v147, 4294967295
  %v165 = vsel %vm92, %v151, 4294967295
  %v166 = vsel %vm93, %v155, 4294967295
  %v167 = vsel %vm94, %v159, 4294967295
  %v168 = vld [vmem:[%s71] sm:$0xff]
  %v170 = vlaneseq
  %v171 = vshrl.u32 %v170, 7
  %v172 = vsub.s32 0, %v171
  %v173 = vrot.slane %v168, %v172
  %v174 = vlaneseq
  %v175 = vshrl.u32 %v174, 7
  %v176 = vsub.s32 1, %v175
  %v177 = vrot.slane %v168, %v176
  %v178 = vlaneseq
  %v179 = vshrl.u32 %v178, 7
  %v180 = vsub.s32 2, %v179
  %v181 = vrot.slane %v168, %v180
  %v182 = vlaneseq
  %v183 = vshrl.u32 %v182, 7
  %v184 = vsub.s32 3, %v183
  %v185 = vrot.slane %v168, %v184
  %v186 = vlaneseq
  %v187 = vshrl.u32 %v186, 7
  %v188 = vsub.s32 4, %v187
  %v189 = vrot.slane %v168, %v188
  %v190 = vlaneseq
  %v191 = vshrl.u32 %v190, 7
  %v192 = vsub.s32 5, %v191
  %v193 = vrot.slane %v168, %v192
  %v194 = vlaneseq
  %v195 = vshrl.u32 %v194, 7
  %v196 = vsub.s32 6, %v195
  %v197 = vrot.slane %v168, %v196
  %v198 = vlaneseq
  %v199 = vshrl.u32 %v198, 7
  %v200 = vsub.s32 7, %v199
  %v201 = vrot.slane %v168, %v200
  %v210 = vsel %vm87, %v173, 0.0
  %v211 = vsel %vm88, %v177, 0.0
  %v212 = vsel %vm89, %v181, 0.0
  %v213 = vsel %vm90, %v185, 0.0
  %v214 = vsel %vm91, %v189, 0.0
  %v215 = vsel %vm92, %v193, 0.0
  %v216 = vsel %vm93, %v197, 0.0
  %v217 = vsel %vm94, %v201, 0.0
  %v218 = vlaneseq
  %v219 = vshrl.u32 %v218, 7
  %v220 = vcvt.s32.f32 %v219
  %vm221 = vcmask 1044480
  %v222 = vsel %vm221, %v119, -inf
  %v223 = vrot.slane %v222, 4
  %v224 = vmax.f32 %v222, %v223
  %v225 = vrot.slane %v224, 2
  %v226 = vmax.f32 %v224, %v225
  %v227 = vrot.slane %v226, 1
  %v228 = vmax.f32 %v226, %v227
  %v229 = vsel %vm221, %v120, -inf
  %v230 = vrot.slane %v229, 4
  %v231 = vmax.f32 %v229, %v230
  %v232 = vrot.slane %v231, 2
  %v233 = vmax.f32 %v231, %v232
  %v234 = vrot.slane %v233, 1
  %v235 = vmax.f32 %v233, %v234
  %v236 = vsel %vm221, %v121, -inf
  %v237 = vrot.slane %v236, 4
  %v238 = vmax.f32 %v236, %v237
  %v239 = vrot.slane %v238, 2
  %v240 = vmax.f32 %v238, %v239
  %v241 = vrot.slane %v240, 1
  %v242 = vmax.f32 %v240, %v241
  %v243 = vsel %vm221, %v122, -inf
  %v244 = vrot.slane %v243, 4
  %v245 = vmax.f32 %v243, %v244
  %v246 = vrot.slane %v245, 2
  %v247 = vmax.f32 %v245, %v246
  %v248 = vrot.slane %v247, 1
  %v249 = vmax.f32 %v247, %v248
  %v250 = vsel %vm221, %v123, -inf
  %v251 = vrot.slane %v250, 4
  %v252 = vmax.f32 %v250, %v251
  %v253 = vrot.slane %v252, 2
  %v254 = vmax.f32 %v252, %v253
  %v255 = vrot.slane %v254, 1
  %v256 = vmax.f32 %v254, %v255
  %v257 = vsel %vm221, %v124, -inf
  %v258 = vrot.slane %v257, 4
  %v259 = vmax.f32 %v257, %v258
  %v260 = vrot.slane %v259, 2
  %v261 = vmax.f32 %v259, %v260
  %v262 = vrot.slane %v261, 1
  %v263 = vmax.f32 %v261, %v262
  %v264 = vsel %vm221, %v125, -inf
  %v265 = vrot.slane %v264, 4
  %v266 = vmax.f32 %v264, %v265
  %v267 = vrot.slane %v266, 2
  %v268 = vmax.f32 %v266, %v267
  %v269 = vrot.slane %v268, 1
  %v270 = vmax.f32 %v268, %v269
  %v271 = vsel %vm221, %v126, -inf
  %v272 = vrot.slane %v271, 4
  %v273 = vmax.f32 %v271, %v272
  %v274 = vrot.slane %v273, 2
  %v275 = vmax.f32 %v273, %v274
  %v276 = vrot.slane %v275, 1
  %v277 = vmax.f32 %v275, %v276
  %vm278 = vcmp.eq.f32.partialorder %v119, %v228
  %vm279 = vcmp.eq.f32.partialorder %v120, %v235
  %vm280 = vcmp.eq.f32.partialorder %v121, %v242
  %vm281 = vcmp.eq.f32.partialorder %v122, %v249
  %vm282 = vcmp.eq.f32.partialorder %v123, %v256
  %vm283 = vcmp.eq.f32.partialorder %v124, %v263
  %vm284 = vcmp.eq.f32.partialorder %v125, %v270
  %vm285 = vcmp.eq.f32.partialorder %v126, %v277
  %v286 = vsel %vm278, %v220, 5.0
  %v287 = vsel %vm279, %v220, 5.0
  %v288 = vsel %vm280, %v220, 5.0
  %v289 = vsel %vm281, %v220, 5.0
  %v290 = vsel %vm282, %v220, 5.0
  %v291 = vsel %vm283, %v220, 5.0
  %v292 = vsel %vm284, %v220, 5.0
  %v293 = vsel %vm285, %v220, 5.0
  %v294 = vsel %vm221, %v286, inf
  %v295 = vrot.slane %v294, 4
  %v296 = vmin.f32 %v294, %v295
  %v297 = vrot.slane %v296, 2
  %v298 = vmin.f32 %v296, %v297
  %v299 = vrot.slane %v298, 1
  %v300 = vmin.f32 %v298, %v299
  %v301 = vsel %vm221, %v287, inf
  %v302 = vrot.slane %v301, 4
  %v303 = vmin.f32 %v301, %v302
  %v304 = vrot.slane %v303, 2
  %v305 = vmin.f32 %v303, %v304
  %v306 = vrot.slane %v305, 1
  %v307 = vmin.f32 %v305, %v306
  %v308 = vsel %vm221, %v288, inf
  %v309 = vrot.slane %v308, 4
  %v310 = vmin.f32 %v308, %v309
  %v311 = vrot.slane %v310, 2
  %v312 = vmin.f32 %v310, %v311
  %v313 = vrot.slane %v312, 1
  %v314 = vmin.f32 %v312, %v313
  %v315 = vsel %vm221, %v289, inf
  %v316 = vrot.slane %v315, 4
  %v317 = vmin.f32 %v315, %v316
  %v318 = vrot.slane %v317, 2
  %v319 = vmin.f32 %v317, %v318
  %v320 = vrot.slane %v319, 1
  %v321 = vmin.f32 %v319, %v320
  %v322 = vsel %vm221, %v290, inf
  %v323 = vrot.slane %v322, 4
  %v324 = vmin.f32 %v322, %v323
  %v325 = vrot.slane %v324, 2
  %v326 = vmin.f32 %v324, %v325
  %v327 = vrot.slane %v326, 1
  %v328 = vmin.f32 %v326, %v327
  %v329 = vsel %vm221, %v291, inf
  %v330 = vrot.slane %v329, 4
  %v331 = vmin.f32 %v329, %v330
  %v332 = vrot.slane %v331, 2
  %v333 = vmin.f32 %v331, %v332
  %v334 = vrot.slane %v333, 1
  %v335 = vmin.f32 %v333, %v334
  %v336 = vsel %vm221, %v292, inf
  %v337 = vrot.slane %v336, 4
  %v338 = vmin.f32 %v336, %v337
  %v339 = vrot.slane %v338, 2
  %v340 = vmin.f32 %v338, %v339
  %v341 = vrot.slane %v340, 1
  %v342 = vmin.f32 %v340, %v341
  %v343 = vsel %vm221, %v293, inf
  %v344 = vrot.slane %v343, 4
  %v345 = vmin.f32 %v343, %v344
  %v346 = vrot.slane %v345, 2
  %v347 = vmin.f32 %v345, %v346
  %v348 = vrot.slane %v347, 1
  %v349 = vmin.f32 %v347, %v348
  %v350 = vsel %vm87, %v300, 5.0
  %v351 = vsel %vm88, %v307, 5.0
  %v352 = vsel %vm89, %v314, 5.0
  %v353 = vsel %vm90, %v321, 5.0
  %v354 = vsel %vm91, %v328, 5.0
  %v355 = vsel %vm92, %v335, 5.0
  %v356 = vsel %vm93, %v342, 5.0
  %v357 = vsel %vm94, %v349, 5.0
  %vm358 = vcmp.eq.f32.partialorder %v350, %v220
  %vm359 = vcmp.eq.f32.partialorder %v351, %v220
  %vm360 = vcmp.eq.f32.partialorder %v352, %v220
  %vm361 = vcmp.eq.f32.partialorder %v353, %v220
  %vm362 = vcmp.eq.f32.partialorder %v354, %v220
  %vm363 = vcmp.eq.f32.partialorder %v355, %v220
  %vm364 = vcmp.eq.f32.partialorder %v356, %v220
  %vm365 = vcmp.eq.f32.partialorder %v357, %v220
  %v366 = vsel %vm358, 1, 0
  %v367 = vsel %vm359, 1, 0
  %v368 = vsel %vm360, 1, 0
  %v369 = vsel %vm361, 1, 0
  %v370 = vsel %vm362, 1, 0
  %v371 = vsel %vm363, 1, 0
  %v372 = vsel %vm364, 1, 0
  %v373 = vsel %vm365, 1, 0
  %v374 = vcvt.s32.f32 %v366
  %v375 = vcvt.s32.f32 %v367
  %v376 = vcvt.s32.f32 %v368
  %v377 = vcvt.s32.f32 %v369
  %v378 = vcvt.s32.f32 %v370
  %v379 = vcvt.s32.f32 %v371
  %v380 = vcvt.s32.f32 %v372
  %v381 = vcvt.s32.f32 %v373
  %v382 = vlaneseq
  %v383 = vshrl.u32 %v382, 7
  %v384 = vsub.s32 0, %v383
  %v385 = vrot.slane %v160, %v384
  %v386 = vlaneseq
  %v387 = vshrl.u32 %v386, 7
  %v388 = vsub.s32 0, %v387
  %v389 = vrot.slane %v161, %v388
  %v390 = vlaneseq
  %v391 = vshrl.u32 %v390, 7
  %v392 = vsub.s32 0, %v391
  %v393 = vrot.slane %v162, %v392
  %v394 = vlaneseq
  %v395 = vshrl.u32 %v394, 7
  %v396 = vsub.s32 0, %v395
  %v397 = vrot.slane %v163, %v396
  %v398 = vlaneseq
  %v399 = vshrl.u32 %v398, 7
  %v400 = vsub.s32 0, %v399
  %v401 = vrot.slane %v164, %v400
  %v402 = vlaneseq
  %v403 = vshrl.u32 %v402, 7
  %v404 = vsub.s32 0, %v403
  %v405 = vrot.slane %v165, %v404
  %v406 = vlaneseq
  %v407 = vshrl.u32 %v406, 7
  %v408 = vsub.s32 0, %v407
  %v409 = vrot.slane %v166, %v408
  %v410 = vlaneseq
  %v411 = vshrl.u32 %v410, 7
  %v412 = vsub.s32 0, %v411
  %v413 = vrot.slane %v167, %v412
  %vm414 = vcmp.eq.s32.totalorder %v385, %v219
  %vm415 = vcmp.eq.s32.totalorder %v389, %v219
  %vm416 = vcmp.eq.s32.totalorder %v393, %v219
  %vm417 = vcmp.eq.s32.totalorder %v397, %v219
  %vm418 = vcmp.eq.s32.totalorder %v401, %v219
  %vm419 = vcmp.eq.s32.totalorder %v405, %v219
  %vm420 = vcmp.eq.s32.totalorder %v409, %v219
  %vm421 = vcmp.eq.s32.totalorder %v413, %v219
  %v422 = vsel %vm414, 1, 0
  %v423 = vsel %vm415, 1, 0
  %v424 = vsel %vm416, 1, 0
  %v425 = vsel %vm417, 1, 0
  %v426 = vsel %vm418, 1, 0
  %v427 = vsel %vm419, 1, 0
  %v428 = vsel %vm420, 1, 0
  %v429 = vsel %vm421, 1, 0
  %v430 = vcvt.s32.f32 %v422
  %v431 = vcvt.s32.f32 %v423
  %v432 = vcvt.s32.f32 %v424
  %v433 = vcvt.s32.f32 %v425
  %v434 = vcvt.s32.f32 %v426
  %v435 = vcvt.s32.f32 %v427
  %v436 = vcvt.s32.f32 %v428
  %v437 = vcvt.s32.f32 %v429
  %v438 = vsub.f32 %v119, %v228
  %v439 = vsub.f32 %v120, %v235
  %v440 = vsub.f32 %v121, %v242
  %v441 = vsub.f32 %v122, %v249
  %v442 = vsub.f32 %v123, %v256
  %v443 = vsub.f32 %v124, %v263
  %v444 = vsub.f32 %v125, %v270
  %v445 = vsub.f32 %v126, %v277
  %v446 = vmul.f32 %v438, 1.442695
  %v447 = vpow.pop %v446
  %v448 = vmul.f32 %v439, 1.442695
  %v449 = vpow.pop %v448
  %v450 = vmul.f32 %v440, 1.442695
  %v451 = vpow.pop %v450
  %v452 = vmul.f32 %v441, 1.442695
  %v453 = vpow.pop %v452
  %v454 = vmul.f32 %v442, 1.442695
  %v455 = vpow.pop %v454
  %v456 = vmul.f32 %v443, 1.442695
  %v457 = vpow.pop %v456
  %v458 = vmul.f32 %v444, 1.442695
  %v459 = vpow.pop %v458
  %v460 = vmul.f32 %v445, 1.442695
  %v461 = vpow.pop %v460
  %v462 = vsel %vm221, %v447, 0.0
  %v463 = vrot.slane %v462, 4
  %v464 = vadd.f32 %v462, %v463
  %v465 = vrot.slane %v464, 2
  %v466 = vadd.f32 %v464, %v465
  %v467 = vrot.slane %v466, 1
  %v468 = vadd.f32 %v466, %v467
  %v469 = vsel %vm221, %v449, 0.0
  %v470 = vrot.slane %v469, 4
  %v471 = vadd.f32 %v469, %v470
  %v472 = vrot.slane %v471, 2
  %v473 = vadd.f32 %v471, %v472
  %v474 = vrot.slane %v473, 1
  %v475 = vadd.f32 %v473, %v474
  %v476 = vsel %vm221, %v451, 0.0
  %v477 = vrot.slane %v476, 4
  %v478 = vadd.f32 %v476, %v477
  %v479 = vrot.slane %v478, 2
  %v480 = vadd.f32 %v478, %v479
  %v481 = vrot.slane %v480, 1
  %v482 = vadd.f32 %v480, %v481
  %v483 = vsel %vm221, %v453, 0.0
  %v484 = vrot.slane %v483, 4
  %v485 = vadd.f32 %v483, %v484
  %v486 = vrot.slane %v485, 2
  %v487 = vadd.f32 %v485, %v486
  %v488 = vrot.slane %v487, 1
  %v489 = vadd.f32 %v487, %v488
  %v490 = vsel %vm221, %v455, 0.0
  %v491 = vrot.slane %v490, 4
  %v492 = vadd.f32 %v490, %v491
  %v493 = vrot.slane %v492, 2
  %v494 = vadd.f32 %v492, %v493
  %v495 = vrot.slane %v494, 1
  %v496 = vadd.f32 %v494, %v495
  %v497 = vsel %vm221, %v457, 0.0
  %v498 = vrot.slane %v497, 4
  %v499 = vadd.f32 %v497, %v498
  %v500 = vrot.slane %v499, 2
  %v501 = vadd.f32 %v499, %v500
  %v502 = vrot.slane %v501, 1
  %v503 = vadd.f32 %v501, %v502
  %v504 = vsel %vm221, %v459, 0.0
  %v505 = vrot.slane %v504, 4
  %v506 = vadd.f32 %v504, %v505
  %v507 = vrot.slane %v506, 2
  %v508 = vadd.f32 %v506, %v507
  %v509 = vrot.slane %v508, 1
  %v510 = vadd.f32 %v508, %v509
  %v511 = vsel %vm221, %v461, 0.0
  %v512 = vrot.slane %v511, 4
  %v513 = vadd.f32 %v511, %v512
  %v514 = vrot.slane %v513, 2
  %v515 = vadd.f32 %v513, %v514
  %v516 = vrot.slane %v515, 1
  %v517 = vadd.f32 %v515, %v516
  %v518 = vlog2.pop %v468
  %v519 = vmul.f32 %v518, 0.6931472
  %v520 = vlog2.pop %v475
  %v521 = vmul.f32 %v520, 0.6931472
  %v522 = vlog2.pop %v482
  %v523 = vmul.f32 %v522, 0.6931472
  %v524 = vlog2.pop %v489
  %v525 = vmul.f32 %v524, 0.6931472
  %v526 = vlog2.pop %v496
  %v527 = vmul.f32 %v526, 0.6931472
  %v528 = vlog2.pop %v503
  %v529 = vmul.f32 %v528, 0.6931472
  %v530 = vlog2.pop %v510
  %v531 = vmul.f32 %v530, 0.6931472
  %v532 = vlog2.pop %v517
  %v533 = vmul.f32 %v532, 0.6931472
  %v534 = vadd.f32 %v228, %v519
  %v535 = vadd.f32 %v235, %v521
  %v536 = vadd.f32 %v242, %v523
  %v537 = vadd.f32 %v249, %v525
  %v538 = vadd.f32 %v256, %v527
  %v539 = vadd.f32 %v263, %v529
  %v540 = vadd.f32 %v270, %v531
  %v541 = vadd.f32 %v277, %v533
  %v542 = vsel %vm87, %v534, 0.0
  %v543 = vsel %vm88, %v535, 0.0
  %v544 = vsel %vm89, %v536, 0.0
  %v545 = vsel %vm90, %v537, 0.0
  %v546 = vsel %vm91, %v538, 0.0
  %v547 = vsel %vm92, %v539, 0.0
  %v548 = vsel %vm93, %v540, 0.0
  %v549 = vsel %vm94, %v541, 0.0
  %v550 = vsel %vm221, %v374, 0.0
  %v551 = vsel %vm221, %v375, 0.0
  %v552 = vadd.f32 %v550, %v551
  %v553 = vsel %vm221, %v376, 0.0
  %v554 = vadd.f32 %v552, %v553
  %v555 = vsel %vm221, %v377, 0.0
  %v556 = vadd.f32 %v554, %v555
  %v557 = vsel %vm221, %v378, 0.0
  %v558 = vadd.f32 %v556, %v557
  %v559 = vsel %vm221, %v379, 0.0
  %v560 = vadd.f32 %v558, %v559
  %v561 = vsel %vm221, %v380, 0.0
  %v562 = vadd.f32 %v560, %v561
  %v563 = vsel %vm221, %v381, 0.0
  %v564 = vadd.f32 %v562, %v563
  %565 = vadd.xlane.f32.xlu0 %v564
  %v566 = vpop.xlane.xlu0 %565
  %v567 = vlaneseq
  %v568 = vshrl.u32 %v567, 7
  %v569 = vsub.s32 0, %v568
  %v570 = vrot.slane %v210, %v569
  %v571 = vlaneseq
  %v572 = vshrl.u32 %v571, 7
  %v573 = vsub.s32 0, %v572
  %v574 = vrot.slane %v211, %v573
  %v575 = vlaneseq
  %v576 = vshrl.u32 %v575, 7
  %v577 = vsub.s32 0, %v576
  %v578 = vrot.slane %v212, %v577
  %v579 = vlaneseq
  %v580 = vshrl.u32 %v579, 7
  %v581 = vsub.s32 0, %v580
  %v582 = vrot.slane %v213, %v581
  %v583 = vlaneseq
  %v584 = vshrl.u32 %v583, 7
  %v585 = vsub.s32 0, %v584
  %v586 = vrot.slane %v214, %v585
  %v587 = vlaneseq
  %v588 = vshrl.u32 %v587, 7
  %v589 = vsub.s32 0, %v588
  %v590 = vrot.slane %v215, %v589
  %v591 = vlaneseq
  %v592 = vshrl.u32 %v591, 7
  %v593 = vsub.s32 0, %v592
  %v594 = vrot.slane %v216, %v593
  %v595 = vlaneseq
  %v596 = vshrl.u32 %v595, 7
  %v597 = vsub.s32 0, %v596
  %v598 = vrot.slane %v217, %v597
  %v599 = vmul.f32 %v374, %v570
  %v600 = vmul.f32 %v375, %v574
  %v601 = vmul.f32 %v376, %v578
  %v602 = vmul.f32 %v377, %v582
  %v603 = vmul.f32 %v378, %v586
  %v604 = vmul.f32 %v379, %v590
  %v605 = vmul.f32 %v380, %v594
  %v606 = vmul.f32 %v381, %v598
  %v607 = vsel %vm221, %v599, 0.0
  %v608 = vsel %vm221, %v600, 0.0
  %v609 = vadd.f32 %v607, %v608
  %v610 = vsel %vm221, %v601, 0.0
  %v611 = vadd.f32 %v609, %v610
  %v612 = vsel %vm221, %v602, 0.0
  %v613 = vadd.f32 %v611, %v612
  %v614 = vsel %vm221, %v603, 0.0
  %v615 = vadd.f32 %v613, %v614
  %v616 = vsel %vm221, %v604, 0.0
  %v617 = vadd.f32 %v615, %v616
  %v618 = vsel %vm221, %v605, 0.0
  %v619 = vadd.f32 %v617, %v618
  %v620 = vsel %vm221, %v606, 0.0
  %v621 = vadd.f32 %v619, %v620
  %622 = vadd.xlane.f32.xlu0 %v621
  %v623 = vpop.xlane.xlu0 %622
  %v624 = vsel %vm221, %v430, 0.0
  %v625 = vsel %vm221, %v431, 0.0
  %v626 = vadd.f32 %v624, %v625
  %v627 = vsel %vm221, %v432, 0.0
  %v628 = vadd.f32 %v626, %v627
  %v629 = vsel %vm221, %v433, 0.0
  %v630 = vadd.f32 %v628, %v629
  %v631 = vsel %vm221, %v434, 0.0
  %v632 = vadd.f32 %v630, %v631
  %v633 = vsel %vm221, %v435, 0.0
  %v634 = vadd.f32 %v632, %v633
  %v635 = vsel %vm221, %v436, 0.0
  %v636 = vadd.f32 %v634, %v635
  %v637 = vsel %vm221, %v437, 0.0
  %v638 = vadd.f32 %v636, %v637
  %639 = vadd.xlane.f32.xlu0 %v638
  %v640 = vpop.xlane.xlu0 %639
  %v641 = vmul.f32 %v430, %v542
  %v642 = vmul.f32 %v431, %v543
  %v643 = vmul.f32 %v432, %v544
  %v644 = vmul.f32 %v433, %v545
  %v645 = vmul.f32 %v434, %v546
  %v646 = vmul.f32 %v435, %v547
  %v647 = vmul.f32 %v436, %v548
  %v648 = vmul.f32 %v437, %v549
  %v649 = vsel %vm221, %v641, 0.0
  %v650 = vsel %vm221, %v642, 0.0
  %v651 = vadd.f32 %v649, %v650
  %v652 = vsel %vm221, %v643, 0.0
  %v653 = vadd.f32 %v651, %v652
  %v654 = vsel %vm221, %v644, 0.0
  %v655 = vadd.f32 %v653, %v654
  %v656 = vsel %vm221, %v645, 0.0
  %v657 = vadd.f32 %v655, %v656
  %v658 = vsel %vm221, %v646, 0.0
  %v659 = vadd.f32 %v657, %v658
  %v660 = vsel %vm221, %v647, 0.0
  %v661 = vadd.f32 %v659, %v660
  %v662 = vsel %vm221, %v648, 0.0
  %v663 = vadd.f32 %v661, %v662
  %664 = vadd.xlane.f32.xlu0 %v663
  %v665 = vpop.xlane.xlu0 %664
  %v666 = vmul.f32 %v430, %v119
  %v667 = vmul.f32 %v431, %v120
  %v668 = vmul.f32 %v432, %v121
  %v669 = vmul.f32 %v433, %v122
  %v670 = vmul.f32 %v434, %v123
  %v671 = vmul.f32 %v435, %v124
  %v672 = vmul.f32 %v436, %v125
  %v673 = vmul.f32 %v437, %v126
  %v674 = vsel %vm221, %v666, 0.0
  %v675 = vsel %vm221, %v667, 0.0
  %v676 = vadd.f32 %v674, %v675
  %v677 = vsel %vm221, %v668, 0.0
  %v678 = vadd.f32 %v676, %v677
  %v679 = vsel %vm221, %v669, 0.0
  %v680 = vadd.f32 %v678, %v679
  %v681 = vsel %vm221, %v670, 0.0
  %v682 = vadd.f32 %v680, %v681
  %v683 = vsel %vm221, %v671, 0.0
  %v684 = vadd.f32 %v682, %v683
  %v685 = vsel %vm221, %v672, 0.0
  %v686 = vadd.f32 %v684, %v685
  %v687 = vsel %vm221, %v673, 0.0
  %v688 = vadd.f32 %v686, %v687
  %689 = vadd.xlane.f32.xlu0 %v688
  %v690 = vpop.xlane.xlu0 %689
  %v691 = vsub.f32 %v665, %v690
  %v692 = vadd.f32 %v542, %v543
  %v693 = vadd.f32 %v692, %v544
  %v694 = vadd.f32 %v693, %v545
  %v695 = vadd.f32 %v694, %v546
  %v696 = vadd.f32 %v695, %v547
  %v697 = vadd.f32 %v696, %v548
  %v698 = vadd.f32 %v697, %v549
  %699 = vadd.xlane.f32.xlu0 %v698
  %v700 = vpop.xlane.xlu0 %699
  %v701 = vsel %vm221, %v119, 0.0
  %v702 = vsel %vm221, %v120, 0.0
  %v703 = vadd.f32 %v701, %v702
  %v704 = vsel %vm221, %v121, 0.0
  %v705 = vadd.f32 %v703, %v704
  %v706 = vsel %vm221, %v122, 0.0
  %v707 = vadd.f32 %v705, %v706
  %v708 = vsel %vm221, %v123, 0.0
  %v709 = vadd.f32 %v707, %v708
  %v710 = vsel %vm221, %v124, 0.0
  %v711 = vadd.f32 %v709, %v710
  %v712 = vsel %vm221, %v125, 0.0
  %v713 = vadd.f32 %v711, %v712
  %v714 = vsel %vm221, %v126, 0.0
  %v715 = vadd.f32 %v713, %v714
  %716 = vadd.xlane.f32.xlu0 %v715
  %v717 = vpop.xlane.xlu0 %716
  %v718 = vsub.f32 %v700, %v717
  %vm719 = vcmp.eq.s32.totalorder %v76, 0
  %v720 = vsel %vm719, %v566, 0.0
  %vm721 = vcmp.eq.s32.totalorder %v76, 1
  %v722 = vsel %vm721, %v623, 0.0
  %v723 = vadd.f32 %v720, %v722
  %vm724 = vcmp.eq.s32.totalorder %v76, 2
  %v725 = vsel %vm724, %v640, 0.0
  %v726 = vadd.f32 %v723, %v725
  %vm727 = vcmp.eq.s32.totalorder %v76, 3
  %v728 = vsel %vm727, %v691, 0.0
  %v729 = vadd.f32 %v726, %v728
  %vm730 = vcmp.eq.s32.totalorder %v76, 4
  %v731 = vsel %vm730, %v718, 0.0
  %v732 = vadd.f32 %v729, %v731
  %p733 = scmp.eq.s32.totalorder 0, 0
  // Predicated region
  $region14: #{bridge_structure_loss.1} parent=0 // pred_check
    %p734 = pneg %p733
  $region15: #{bridge_structure_loss.1} parent=0 // pred_check_branch
    %736 = sbr.rel (%p734) target = $region17
  $region16: #{bridge_structure_loss.1} parent=0 // pred_region
    %737 = vst [vmem:[%s3] sm:$0x1f] %v732
  $region17: #{bridge_structure_loss.1} parent=0 // pred_fallthru
    _
  %p738 = scmp.ne.s32.totalorder 0, 0
  // Predicated region
  $region18: #{bridge_structure_loss.1} parent=0 // pred_check
    %p739 = pneg %p738
  $region19: #{bridge_structure_loss.1} parent=0 // pred_check_branch
    %741 = sbr.rel (%p739) target = $region21
  $region20: #{bridge_structure_loss.1} parent=0 // pred_region
    %v742 = vld [vmem:[%s3] sm:$0x1f]
    %v743 = vadd.f32 %v742, %v732
    %744 = vst [vmem:[%s3] sm:$0x1f] %v743
  $region21: #{bridge_structure_loss.1} parent=0 // pred_fallthru
    _
  %s745 = scalar_lea.vmem %s57, 64
  %v746 = vld [vmem:[%s745] sm:$0x1f]
  %v747 = vld [vmem:[%s745 + $0x8] sm:$0x1f]
  %v748 = vld [vmem:[%s745 + $0x10] sm:$0x1f]
  %v749 = vld [vmem:[%s745 + $0x18] sm:$0x1f]
  %v750 = vld [vmem:[%s745 + $0x20] sm:$0x1f]
  %v751 = vld [vmem:[%s745 + $0x28] sm:$0x1f]
  %v752 = vld [vmem:[%s745 + $0x30] sm:$0x1f]
  %v753 = vld [vmem:[%s745 + $0x38] sm:$0x1f]
  %v754 = vsel %vm111, %v746, 0.0
  %v755 = vsel %vm112, %v747, 0.0
  %v756 = vsel %vm113, %v748, 0.0
  %v757 = vsel %vm114, %v749, 0.0
  %v758 = vsel %vm115, %v750, 0.0
  %v759 = vsel %vm116, %v751, 0.0
  %v760 = vsel %vm117, %v752, 0.0
  %v761 = vsel %vm118, %v753, 0.0
  %s762 = scalar_lea.vmem %s64, 8
  %v763 = vld [vmem:[%s762] sm:$0xff]
  %v764 = vlaneseq
  %v765 = vshrl.u32 %v764, 7
  %v766 = vsub.s32 0, %v765
  %v767 = vrot.slane %v763, %v766
  %v768 = vlaneseq
  %v769 = vshrl.u32 %v768, 7
  %v770 = vsub.s32 1, %v769
  %v771 = vrot.slane %v763, %v770
  %v772 = vlaneseq
  %v773 = vshrl.u32 %v772, 7
  %v774 = vsub.s32 2, %v773
  %v775 = vrot.slane %v763, %v774
  %v776 = vlaneseq
  %v777 = vshrl.u32 %v776, 7
  %v778 = vsub.s32 3, %v777
  %v779 = vrot.slane %v763, %v778
  %v780 = vlaneseq
  %v781 = vshrl.u32 %v780, 7
  %v782 = vsub.s32 4, %v781
  %v783 = vrot.slane %v763, %v782
  %v784 = vlaneseq
  %v785 = vshrl.u32 %v784, 7
  %v786 = vsub.s32 5, %v785
  %v787 = vrot.slane %v763, %v786
  %v788 = vlaneseq
  %v789 = vshrl.u32 %v788, 7
  %v790 = vsub.s32 6, %v789
  %v791 = vrot.slane %v763, %v790
  %v792 = vlaneseq
  %v793 = vshrl.u32 %v792, 7
  %v794 = vsub.s32 7, %v793
  %v795 = vrot.slane %v763, %v794
  %v796 = vsel %vm87, %v767, 4294967295
  %v797 = vsel %vm88, %v771, 4294967295
  %v798 = vsel %vm89, %v775, 4294967295
  %v799 = vsel %vm90, %v779, 4294967295
  %v800 = vsel %vm91, %v783, 4294967295
  %v801 = vsel %vm92, %v787, 4294967295
  %v802 = vsel %vm93, %v791, 4294967295
  %v803 = vsel %vm94, %v795, 4294967295
  %s804 = scalar_lea.vmem %s71, 8
  %v805 = vld [vmem:[%s804] sm:$0xff]
  %v807 = vlaneseq
  %v808 = vshrl.u32 %v807, 7
  %v809 = vsub.s32 0, %v808
  %v810 = vrot.slane %v805, %v809
  %v811 = vlaneseq
  %v812 = vshrl.u32 %v811, 7
  %v813 = vsub.s32 1, %v812
  %v814 = vrot.slane %v805, %v813
  %v815 = vlaneseq
  %v816 = vshrl.u32 %v815, 7
  %v817 = vsub.s32 2, %v816
  %v818 = vrot.slane %v805, %v817
  %v819 = vlaneseq
  %v820 = vshrl.u32 %v819, 7
  %v821 = vsub.s32 3, %v820
  %v822 = vrot.slane %v805, %v821
  %v823 = vlaneseq
  %v824 = vshrl.u32 %v823, 7
  %v825 = vsub.s32 4, %v824
  %v826 = vrot.slane %v805, %v825
  %v827 = vlaneseq
  %v828 = vshrl.u32 %v827, 7
  %v829 = vsub.s32 5, %v828
  %v830 = vrot.slane %v805, %v829
  %v831 = vlaneseq
  %v832 = vshrl.u32 %v831, 7
  %v833 = vsub.s32 6, %v832
  %v834 = vrot.slane %v805, %v833
  %v835 = vlaneseq
  %v836 = vshrl.u32 %v835, 7
  %v837 = vsub.s32 7, %v836
  %v838 = vrot.slane %v805, %v837
  %v847 = vsel %vm87, %v810, 0.0
  %v848 = vsel %vm88, %v814, 0.0
  %v849 = vsel %vm89, %v818, 0.0
  %v850 = vsel %vm90, %v822, 0.0
  %v851 = vsel %vm91, %v826, 0.0
  %v852 = vsel %vm92, %v830, 0.0
  %v853 = vsel %vm93, %v834, 0.0
  %v854 = vsel %vm94, %v838, 0.0
  %v855 = vsel %vm221, %v754, -inf
  %v856 = vrot.slane %v855, 4
  %v857 = vmax.f32 %v855, %v856
  %v858 = vrot.slane %v857, 2
  %v859 = vmax.f32 %v857, %v858
  %v860 = vrot.slane %v859, 1
  %v861 = vmax.f32 %v859, %v860
  %v862 = vsel %vm221, %v755, -inf
  %v863 = vrot.slane %v862, 4
  %v864 = vmax.f32 %v862, %v863
  %v865 = vrot.slane %v864, 2
  %v866 = vmax.f32 %v864, %v865
  %v867 = vrot.slane %v866, 1
  %v868 = vmax.f32 %v866, %v867
  %v869 = vsel %vm221, %v756, -inf
  %v870 = vrot.slane %v869, 4
  %v871 = vmax.f32 %v869, %v870
  %v872 = vrot.slane %v871, 2
  %v873 = vmax.f32 %v871, %v872
  %v874 = vrot.slane %v873, 1
  %v875 = vmax.f32 %v873, %v874
  %v876 = vsel %vm221, %v757, -inf
  %v877 = vrot.slane %v876, 4
  %v878 = vmax.f32 %v876, %v877
  %v879 = vrot.slane %v878, 2
  %v880 = vmax.f32 %v878, %v879
  %v881 = vrot.slane %v880, 1
  %v882 = vmax.f32 %v880, %v881
  %v883 = vsel %vm221, %v758, -inf
  %v884 = vrot.slane %v883, 4
  %v885 = vmax.f32 %v883, %v884
  %v886 = vrot.slane %v885, 2
  %v887 = vmax.f32 %v885, %v886
  %v888 = vrot.slane %v887, 1
  %v889 = vmax.f32 %v887, %v888
  %v890 = vsel %vm221, %v759, -inf
  %v891 = vrot.slane %v890, 4
  %v892 = vmax.f32 %v890, %v891
  %v893 = vrot.slane %v892, 2
  %v894 = vmax.f32 %v892, %v893
  %v895 = vrot.slane %v894, 1
  %v896 = vmax.f32 %v894, %v895
  %v897 = vsel %vm221, %v760, -inf
  %v898 = vrot.slane %v897, 4
  %v899 = vmax.f32 %v897, %v898
  %v900 = vrot.slane %v899, 2
  %v901 = vmax.f32 %v899, %v900
  %v902 = vrot.slane %v901, 1
  %v903 = vmax.f32 %v901, %v902
  %v904 = vsel %vm221, %v761, -inf
  %v905 = vrot.slane %v904, 4
  %v906 = vmax.f32 %v904, %v905
  %v907 = vrot.slane %v906, 2
  %v908 = vmax.f32 %v906, %v907
  %v909 = vrot.slane %v908, 1
  %v910 = vmax.f32 %v908, %v909
  %vm911 = vcmp.eq.f32.partialorder %v754, %v861
  %vm912 = vcmp.eq.f32.partialorder %v755, %v868
  %vm913 = vcmp.eq.f32.partialorder %v756, %v875
  %vm914 = vcmp.eq.f32.partialorder %v757, %v882
  %vm915 = vcmp.eq.f32.partialorder %v758, %v889
  %vm916 = vcmp.eq.f32.partialorder %v759, %v896
  %vm917 = vcmp.eq.f32.partialorder %v760, %v903
  %vm918 = vcmp.eq.f32.partialorder %v761, %v910
  %v919 = vsel %vm911, %v220, 5.0
  %v920 = vsel %vm912, %v220, 5.0
  %v921 = vsel %vm913, %v220, 5.0
  %v922 = vsel %vm914, %v220, 5.0
  %v923 = vsel %vm915, %v220, 5.0
  %v924 = vsel %vm916, %v220, 5.0
  %v925 = vsel %vm917, %v220, 5.0
  %v926 = vsel %vm918, %v220, 5.0
  %v927 = vsel %vm221, %v919, inf
  %v928 = vrot.slane %v927, 4
  %v929 = vmin.f32 %v927, %v928
  %v930 = vrot.slane %v929, 2
  %v931 = vmin.f32 %v929, %v930
  %v932 = vrot.slane %v931, 1
  %v933 = vmin.f32 %v931, %v932
  %v934 = vsel %vm221, %v920, inf
  %v935 = vrot.slane %v934, 4
  %v936 = vmin.f32 %v934, %v935
  %v937 = vrot.slane %v936, 2
  %v938 = vmin.f32 %v936, %v937
  %v939 = vrot.slane %v938, 1
  %v940 = vmin.f32 %v938, %v939
  %v941 = vsel %vm221, %v921, inf
  %v942 = vrot.slane %v941, 4
  %v943 = vmin.f32 %v941, %v942
  %v944 = vrot.slane %v943, 2
  %v945 = vmin.f32 %v943, %v944
  %v946 = vrot.slane %v945, 1
  %v947 = vmin.f32 %v945, %v946
  %v948 = vsel %vm221, %v922, inf
  %v949 = vrot.slane %v948, 4
  %v950 = vmin.f32 %v948, %v949
  %v951 = vrot.slane %v950, 2
  %v952 = vmin.f32 %v950, %v951
  %v953 = vrot.slane %v952, 1
  %v954 = vmin.f32 %v952, %v953
  %v955 = vsel %vm221, %v923, inf
  %v956 = vrot.slane %v955, 4
  %v957 = vmin.f32 %v955, %v956
  %v958 = vrot.slane %v957, 2
  %v959 = vmin.f32 %v957, %v958
  %v960 = vrot.slane %v959, 1
  %v961 = vmin.f32 %v959, %v960
  %v962 = vsel %vm221, %v924, inf
  %v963 = vrot.slane %v962, 4
  %v964 = vmin.f32 %v962, %v963
  %v965 = vrot.slane %v964, 2
  %v966 = vmin.f32 %v964, %v965
  %v967 = vrot.slane %v966, 1
  %v968 = vmin.f32 %v966, %v967
  %v969 = vsel %vm221, %v925, inf
  %v970 = vrot.slane %v969, 4
  %v971 = vmin.f32 %v969, %v970
  %v972 = vrot.slane %v971, 2
  %v973 = vmin.f32 %v971, %v972
  %v974 = vrot.slane %v973, 1
  %v975 = vmin.f32 %v973, %v974
  %v976 = vsel %vm221, %v926, inf
  %v977 = vrot.slane %v976, 4
  %v978 = vmin.f32 %v976, %v977
  %v979 = vrot.slane %v978, 2
  %v980 = vmin.f32 %v978, %v979
  %v981 = vrot.slane %v980, 1
  %v982 = vmin.f32 %v980, %v981
  %v983 = vsel %vm87, %v933, 5.0
  %v984 = vsel %vm88, %v940, 5.0
  %v985 = vsel %vm89, %v947, 5.0
  %v986 = vsel %vm90, %v954, 5.0
  %v987 = vsel %vm91, %v961, 5.0
  %v988 = vsel %vm92, %v968, 5.0
  %v989 = vsel %vm93, %v975, 5.0
  %v990 = vsel %vm94, %v982, 5.0
  %vm991 = vcmp.eq.f32.partialorder %v983, %v220
  %vm992 = vcmp.eq.f32.partialorder %v984, %v220
  %vm993 = vcmp.eq.f32.partialorder %v985, %v220
  %vm994 = vcmp.eq.f32.partialorder %v986, %v220
  %vm995 = vcmp.eq.f32.partialorder %v987, %v220
  %vm996 = vcmp.eq.f32.partialorder %v988, %v220
  %vm997 = vcmp.eq.f32.partialorder %v989, %v220
  %vm998 = vcmp.eq.f32.partialorder %v990, %v220
  %v999 = vsel %vm991, 1, 0
  %v1000 = vsel %vm992, 1, 0
  %v1001 = vsel %vm993, 1, 0
  %v1002 = vsel %vm994, 1, 0
  %v1003 = vsel %vm995, 1, 0
  %v1004 = vsel %vm996, 1, 0
  %v1005 = vsel %vm997, 1, 0
  %v1006 = vsel %vm998, 1, 0
  %v1007 = vcvt.s32.f32 %v999
  %v1008 = vcvt.s32.f32 %v1000
  %v1009 = vcvt.s32.f32 %v1001
  %v1010 = vcvt.s32.f32 %v1002
  %v1011 = vcvt.s32.f32 %v1003
  %v1012 = vcvt.s32.f32 %v1004
  %v1013 = vcvt.s32.f32 %v1005
  %v1014 = vcvt.s32.f32 %v1006
  %v1015 = vlaneseq
  %v1016 = vshrl.u32 %v1015, 7
  %v1017 = vsub.s32 0, %v1016
  %v1018 = vrot.slane %v796, %v1017
  %v1019 = vlaneseq
  %v1020 = vshrl.u32 %v1019, 7
  %v1021 = vsub.s32 0, %v1020
  %v1022 = vrot.slane %v797, %v1021
  %v1023 = vlaneseq
  %v1024 = vshrl.u32 %v1023, 7
  %v1025 = vsub.s32 0, %v1024
  %v1026 = vrot.slane %v798, %v1025
  %v1027 = vlaneseq
  %v1028 = vshrl.u32 %v1027, 7
  %v1029 = vsub.s32 0, %v1028
  %v1030 = vrot.slane %v799, %v1029
  %v1031 = vlaneseq
  %v1032 = vshrl.u32 %v1031, 7
  %v1033 = vsub.s32 0, %v1032
  %v1034 = vrot.slane %v800, %v1033
  %v1035 = vlaneseq
  %v1036 = vshrl.u32 %v1035, 7
  %v1037 = vsub.s32 0, %v1036
  %v1038 = vrot.slane %v801, %v1037
  %v1039 = vlaneseq
  %v1040 = vshrl.u32 %v1039, 7
  %v1041 = vsub.s32 0, %v1040
  %v1042 = vrot.slane %v802, %v1041
  %v1043 = vlaneseq
  %v1044 = vshrl.u32 %v1043, 7
  %v1045 = vsub.s32 0, %v1044
  %v1046 = vrot.slane %v803, %v1045
  %vm1047 = vcmp.eq.s32.totalorder %v1018, %v219
  %vm1048 = vcmp.eq.s32.totalorder %v1022, %v219
  %vm1049 = vcmp.eq.s32.totalorder %v1026, %v219
  %vm1050 = vcmp.eq.s32.totalorder %v1030, %v219
  %vm1051 = vcmp.eq.s32.totalorder %v1034, %v219
  %vm1052 = vcmp.eq.s32.totalorder %v1038, %v219
  %vm1053 = vcmp.eq.s32.totalorder %v1042, %v219
  %vm1054 = vcmp.eq.s32.totalorder %v1046, %v219
  %v1055 = vsel %vm1047, 1, 0
  %v1056 = vsel %vm1048, 1, 0
  %v1057 = vsel %vm1049, 1, 0
  %v1058 = vsel %vm1050, 1, 0
  %v1059 = vsel %vm1051, 1, 0
  %v1060 = vsel %vm1052, 1, 0
  %v1061 = vsel %vm1053, 1, 0
  %v1062 = vsel %vm1054, 1, 0
  %v1063 = vcvt.s32.f32 %v1055
  %v1064 = vcvt.s32.f32 %v1056
  %v1065 = vcvt.s32.f32 %v1057
  %v1066 = vcvt.s32.f32 %v1058
  %v1067 = vcvt.s32.f32 %v1059
  %v1068 = vcvt.s32.f32 %v1060
  %v1069 = vcvt.s32.f32 %v1061
  %v1070 = vcvt.s32.f32 %v1062
  %v1071 = vsub.f32 %v754, %v861
  %v1072 = vsub.f32 %v755, %v868
  %v1073 = vsub.f32 %v756, %v875
  %v1074 = vsub.f32 %v757, %v882
  %v1075 = vsub.f32 %v758, %v889
  %v1076 = vsub.f32 %v759, %v896
  %v1077 = vsub.f32 %v760, %v903
  %v1078 = vsub.f32 %v761, %v910
  %v1079 = vmul.f32 %v1071, 1.442695
  %v1080 = vpow.pop %v1079
  %v1081 = vmul.f32 %v1072, 1.442695
  %v1082 = vpow.pop %v1081
  %v1083 = vmul.f32 %v1073, 1.442695
  %v1084 = vpow.pop %v1083
  %v1085 = vmul.f32 %v1074, 1.442695
  %v1086 = vpow.pop %v1085
  %v1087 = vmul.f32 %v1075, 1.442695
  %v1088 = vpow.pop %v1087
  %v1089 = vmul.f32 %v1076, 1.442695
  %v1090 = vpow.pop %v1089
  %v1091 = vmul.f32 %v1077, 1.442695
  %v1092 = vpow.pop %v1091
  %v1093 = vmul.f32 %v1078, 1.442695
  %v1094 = vpow.pop %v1093
  %v1095 = vsel %vm221, %v1080, 0.0
  %v1096 = vrot.slane %v1095, 4
  %v1097 = vadd.f32 %v1095, %v1096
  %v1098 = vrot.slane %v1097, 2
  %v1099 = vadd.f32 %v1097, %v1098
  %v1100 = vrot.slane %v1099, 1
  %v1101 = vadd.f32 %v1099, %v1100
  %v1102 = vsel %vm221, %v1082, 0.0
  %v1103 = vrot.slane %v1102, 4
  %v1104 = vadd.f32 %v1102, %v1103
  %v1105 = vrot.slane %v1104, 2
  %v1106 = vadd.f32 %v1104, %v1105
  %v1107 = vrot.slane %v1106, 1
  %v1108 = vadd.f32 %v1106, %v1107
  %v1109 = vsel %vm221, %v1084, 0.0
  %v1110 = vrot.slane %v1109, 4
  %v1111 = vadd.f32 %v1109, %v1110
  %v1112 = vrot.slane %v1111, 2
  %v1113 = vadd.f32 %v1111, %v1112
  %v1114 = vrot.slane %v1113, 1
  %v1115 = vadd.f32 %v1113, %v1114
  %v1116 = vsel %vm221, %v1086, 0.0
  %v1117 = vrot.slane %v1116, 4
  %v1118 = vadd.f32 %v1116, %v1117
  %v1119 = vrot.slane %v1118, 2
  %v1120 = vadd.f32 %v1118, %v1119
  %v1121 = vrot.slane %v1120, 1
  %v1122 = vadd.f32 %v1120, %v1121
  %v1123 = vsel %vm221, %v1088, 0.0
  %v1124 = vrot.slane %v1123, 4
  %v1125 = vadd.f32 %v1123, %v1124
  %v1126 = vrot.slane %v1125, 2
  %v1127 = vadd.f32 %v1125, %v1126
  %v1128 = vrot.slane %v1127, 1
  %v1129 = vadd.f32 %v1127, %v1128
  %v1130 = vsel %vm221, %v1090, 0.0
  %v1131 = vrot.slane %v1130, 4
  %v1132 = vadd.f32 %v1130, %v1131
  %v1133 = vrot.slane %v1132, 2
  %v1134 = vadd.f32 %v1132, %v1133
  %v1135 = vrot.slane %v1134, 1
  %v1136 = vadd.f32 %v1134, %v1135
  %v1137 = vsel %vm221, %v1092, 0.0
  %v1138 = vrot.slane %v1137, 4
  %v1139 = vadd.f32 %v1137, %v1138
  %v1140 = vrot.slane %v1139, 2
  %v1141 = vadd.f32 %v1139, %v1140
  %v1142 = vrot.slane %v1141, 1
  %v1143 = vadd.f32 %v1141, %v1142
  %v1144 = vsel %vm221, %v1094, 0.0
  %v1145 = vrot.slane %v1144, 4
  %v1146 = vadd.f32 %v1144, %v1145
  %v1147 = vrot.slane %v1146, 2
  %v1148 = vadd.f32 %v1146, %v1147
  %v1149 = vrot.slane %v1148, 1
  %v1150 = vadd.f32 %v1148, %v1149
  %v1151 = vlog2.pop %v1101
  %v1152 = vmul.f32 %v1151, 0.6931472
  %v1153 = vlog2.pop %v1108
  %v1154 = vmul.f32 %v1153, 0.6931472
  %v1155 = vlog2.pop %v1115
  %v1156 = vmul.f32 %v1155, 0.6931472
  %v1157 = vlog2.pop %v1122
  %v1158 = vmul.f32 %v1157, 0.6931472
  %v1159 = vlog2.pop %v1129
  %v1160 = vmul.f32 %v1159, 0.6931472
  %v1161 = vlog2.pop %v1136
  %v1162 = vmul.f32 %v1161, 0.6931472
  %v1163 = vlog2.pop %v1143
  %v1164 = vmul.f32 %v1163, 0.6931472
  %v1165 = vlog2.pop %v1150
  %v1166 = vmul.f32 %v1165, 0.6931472
  %v1167 = vadd.f32 %v861, %v1152
  %v1168 = vadd.f32 %v868, %v1154
  %v1169 = vadd.f32 %v875, %v1156
  %v1170 = vadd.f32 %v882, %v1158
  %v1171 = vadd.f32 %v889, %v1160
  %v1172 = vadd.f32 %v896, %v1162
  %v1173 = vadd.f32 %v903, %v1164
  %v1174 = vadd.f32 %v910, %v1166
  %v1175 = vsel %vm87, %v1167, 0.0
  %v1176 = vsel %vm88, %v1168, 0.0
  %v1177 = vsel %vm89, %v1169, 0.0
  %v1178 = vsel %vm90, %v1170, 0.0
  %v1179 = vsel %vm91, %v1171, 0.0
  %v1180 = vsel %vm92, %v1172, 0.0
  %v1181 = vsel %vm93, %v1173, 0.0
  %v1182 = vsel %vm94, %v1174, 0.0
  %v1183 = vsel %vm221, %v1007, 0.0
  %v1184 = vsel %vm221, %v1008, 0.0
  %v1185 = vadd.f32 %v1183, %v1184
  %v1186 = vsel %vm221, %v1009, 0.0
  %v1187 = vadd.f32 %v1185, %v1186
  %v1188 = vsel %vm221, %v1010, 0.0
  %v1189 = vadd.f32 %v1187, %v1188
  %v1190 = vsel %vm221, %v1011, 0.0
  %v1191 = vadd.f32 %v1189, %v1190
  %v1192 = vsel %vm221, %v1012, 0.0
  %v1193 = vadd.f32 %v1191, %v1192
  %v1194 = vsel %vm221, %v1013, 0.0
  %v1195 = vadd.f32 %v1193, %v1194
  %v1196 = vsel %vm221, %v1014, 0.0
  %v1197 = vadd.f32 %v1195, %v1196
  %1198 = vadd.xlane.f32.xlu0 %v1197
  %v1199 = vpop.xlane.xlu0 %1198
  %v1200 = vlaneseq
  %v1201 = vshrl.u32 %v1200, 7
  %v1202 = vsub.s32 0, %v1201
  %v1203 = vrot.slane %v847, %v1202
  %v1204 = vlaneseq
  %v1205 = vshrl.u32 %v1204, 7
  %v1206 = vsub.s32 0, %v1205
  %v1207 = vrot.slane %v848, %v1206
  %v1208 = vlaneseq
  %v1209 = vshrl.u32 %v1208, 7
  %v1210 = vsub.s32 0, %v1209
  %v1211 = vrot.slane %v849, %v1210
  %v1212 = vlaneseq
  %v1213 = vshrl.u32 %v1212, 7
  %v1214 = vsub.s32 0, %v1213
  %v1215 = vrot.slane %v850, %v1214
  %v1216 = vlaneseq
  %v1217 = vshrl.u32 %v1216, 7
  %v1218 = vsub.s32 0, %v1217
  %v1219 = vrot.slane %v851, %v1218
  %v1220 = vlaneseq
  %v1221 = vshrl.u32 %v1220, 7
  %v1222 = vsub.s32 0, %v1221
  %v1223 = vrot.slane %v852, %v1222
  %v1224 = vlaneseq
  %v1225 = vshrl.u32 %v1224, 7
  %v1226 = vsub.s32 0, %v1225
  %v1227 = vrot.slane %v853, %v1226
  %v1228 = vlaneseq
  %v1229 = vshrl.u32 %v1228, 7
  %v1230 = vsub.s32 0, %v1229
  %v1231 = vrot.slane %v854, %v1230
  %v1232 = vmul.f32 %v1007, %v1203
  %v1233 = vmul.f32 %v1008, %v1207
  %v1234 = vmul.f32 %v1009, %v1211
  %v1235 = vmul.f32 %v1010, %v1215
  %v1236 = vmul.f32 %v1011, %v1219
  %v1237 = vmul.f32 %v1012, %v1223
  %v1238 = vmul.f32 %v1013, %v1227
  %v1239 = vmul.f32 %v1014, %v1231
  %v1240 = vsel %vm221, %v1232, 0.0
  %v1241 = vsel %vm221, %v1233, 0.0
  %v1242 = vadd.f32 %v1240, %v1241
  %v1243 = vsel %vm221, %v1234, 0.0
  %v1244 = vadd.f32 %v1242, %v1243
  %v1245 = vsel %vm221, %v1235, 0.0
  %v1246 = vadd.f32 %v1244, %v1245
  %v1247 = vsel %vm221, %v1236, 0.0
  %v1248 = vadd.f32 %v1246, %v1247
  %v1249 = vsel %vm221, %v1237, 0.0
  %v1250 = vadd.f32 %v1248, %v1249
  %v1251 = vsel %vm221, %v1238, 0.0
  %v1252 = vadd.f32 %v1250, %v1251
  %v1253 = vsel %vm221, %v1239, 0.0
  %v1254 = vadd.f32 %v1252, %v1253
  %1255 = vadd.xlane.f32.xlu0 %v1254
  %v1256 = vpop.xlane.xlu0 %1255
  %v1257 = vsel %vm221, %v1063, 0.0
  %v1258 = vsel %vm221, %v1064, 0.0
  %v1259 = vadd.f32 %v1257, %v1258
  %v1260 = vsel %vm221, %v1065, 0.0
  %v1261 = vadd.f32 %v1259, %v1260
  %v1262 = vsel %vm221, %v1066, 0.0
  %v1263 = vadd.f32 %v1261, %v1262
  %v1264 = vsel %vm221, %v1067, 0.0
  %v1265 = vadd.f32 %v1263, %v1264
  %v1266 = vsel %vm221, %v1068, 0.0
  %v1267 = vadd.f32 %v1265, %v1266
  %v1268 = vsel %vm221, %v1069, 0.0
  %v1269 = vadd.f32 %v1267, %v1268
  %v1270 = vsel %vm221, %v1070, 0.0
  %v1271 = vadd.f32 %v1269, %v1270
  %1272 = vadd.xlane.f32.xlu0 %v1271
  %v1273 = vpop.xlane.xlu0 %1272
  %v1274 = vmul.f32 %v1063, %v1175
  %v1275 = vmul.f32 %v1064, %v1176
  %v1276 = vmul.f32 %v1065, %v1177
  %v1277 = vmul.f32 %v1066, %v1178
  %v1278 = vmul.f32 %v1067, %v1179
  %v1279 = vmul.f32 %v1068, %v1180
  %v1280 = vmul.f32 %v1069, %v1181
  %v1281 = vmul.f32 %v1070, %v1182
  %v1282 = vsel %vm221, %v1274, 0.0
  %v1283 = vsel %vm221, %v1275, 0.0
  %v1284 = vadd.f32 %v1282, %v1283
  %v1285 = vsel %vm221, %v1276, 0.0
  %v1286 = vadd.f32 %v1284, %v1285
  %v1287 = vsel %vm221, %v1277, 0.0
  %v1288 = vadd.f32 %v1286, %v1287
  %v1289 = vsel %vm221, %v1278, 0.0
  %v1290 = vadd.f32 %v1288, %v1289
  %v1291 = vsel %vm221, %v1279, 0.0
  %v1292 = vadd.f32 %v1290, %v1291
  %v1293 = vsel %vm221, %v1280, 0.0
  %v1294 = vadd.f32 %v1292, %v1293
  %v1295 = vsel %vm221, %v1281, 0.0
  %v1296 = vadd.f32 %v1294, %v1295
  %1297 = vadd.xlane.f32.xlu0 %v1296
  %v1298 = vpop.xlane.xlu0 %1297
  %v1299 = vmul.f32 %v1063, %v754
  %v1300 = vmul.f32 %v1064, %v755
  %v1301 = vmul.f32 %v1065, %v756
  %v1302 = vmul.f32 %v1066, %v757
  %v1303 = vmul.f32 %v1067, %v758
  %v1304 = vmul.f32 %v1068, %v759
  %v1305 = vmul.f32 %v1069, %v760
  %v1306 = vmul.f32 %v1070, %v761
  %v1307 = vsel %vm221, %v1299, 0.0
  %v1308 = vsel %vm221, %v1300, 0.0
  %v1309 = vadd.f32 %v1307, %v1308
  %v1310 = vsel %vm221, %v1301, 0.0
  %v1311 = vadd.f32 %v1309, %v1310
  %v1312 = vsel %vm221, %v1302, 0.0
  %v1313 = vadd.f32 %v1311, %v1312
  %v1314 = vsel %vm221, %v1303, 0.0
  %v1315 = vadd.f32 %v1313, %v1314
  %v1316 = vsel %vm221, %v1304, 0.0
  %v1317 = vadd.f32 %v1315, %v1316
  %v1318 = vsel %vm221, %v1305, 0.0
  %v1319 = vadd.f32 %v1317, %v1318
  %v1320 = vsel %vm221, %v1306, 0.0
  %v1321 = vadd.f32 %v1319, %v1320
  %1322 = vadd.xlane.f32.xlu0 %v1321
  %v1323 = vpop.xlane.xlu0 %1322
  %v1324 = vsub.f32 %v1298, %v1323
  %v1325 = vadd.f32 %v1175, %v1176
  %v1326 = vadd.f32 %v1325, %v1177
  %v1327 = vadd.f32 %v1326, %v1178
  %v1328 = vadd.f32 %v1327, %v1179
  %v1329 = vadd.f32 %v1328, %v1180
  %v1330 = vadd.f32 %v1329, %v1181
  %v1331 = vadd.f32 %v1330, %v1182
  %1332 = vadd.xlane.f32.xlu0 %v1331
  %v1333 = vpop.xlane.xlu0 %1332
  %v1334 = vsel %vm221, %v754, 0.0
  %v1335 = vsel %vm221, %v755, 0.0
  %v1336 = vadd.f32 %v1334, %v1335
  %v1337 = vsel %vm221, %v756, 0.0
  %v1338 = vadd.f32 %v1336, %v1337
  %v1339 = vsel %vm221, %v757, 0.0
  %v1340 = vadd.f32 %v1338, %v1339
  %v1341 = vsel %vm221, %v758, 0.0
  %v1342 = vadd.f32 %v1340, %v1341
  %v1343 = vsel %vm221, %v759, 0.0
  %v1344 = vadd.f32 %v1342, %v1343
  %v1345 = vsel %vm221, %v760, 0.0
  %v1346 = vadd.f32 %v1344, %v1345
  %v1347 = vsel %vm221, %v761, 0.0
  %v1348 = vadd.f32 %v1346, %v1347
  %1349 = vadd.xlane.f32.xlu0 %v1348
  %v1350 = vpop.xlane.xlu0 %1349
  %v1351 = vsub.f32 %v1333, %v1350
  %v1352 = vsel %vm719, %v1199, 0.0
  %v1353 = vsel %vm721, %v1256, 0.0
  %v1354 = vadd.f32 %v1352, %v1353
  %v1355 = vsel %vm724, %v1273, 0.0
  %v1356 = vadd.f32 %v1354, %v1355
  %v1357 = vsel %vm727, %v1324, 0.0
  %v1358 = vadd.f32 %v1356, %v1357
  %v1359 = vsel %vm730, %v1351, 0.0
  %v1360 = vadd.f32 %v1358, %v1359
  // Predicated region
  $region22: #{bridge_structure_loss.1} parent=0 // pred_check
    %p1361 = pneg %p733
  $region23: #{bridge_structure_loss.1} parent=0 // pred_check_branch
    %1363 = sbr.rel (%p1361) target = $region25
  $region24: #{bridge_structure_loss.1} parent=0 // pred_region
    %s1364 = scalar_lea.vmem %s3, 8
    %1365 = vst [vmem:[%s1364] sm:$0x1f] %v1360
  $region25: #{bridge_structure_loss.1} parent=0 // pred_fallthru
    _
  // Predicated region
  $region26: #{bridge_structure_loss.1} parent=0 // pred_check
    %p1366 = pneg %p738
  $region27: #{bridge_structure_loss.1} parent=0 // pred_check_branch
    %1368 = sbr.rel (%p1366) target = $region29
  $region28: #{bridge_structure_loss.1} parent=0 // pred_region
    %s1369 = scalar_lea.vmem %s3, 8
    %v1370 = vld [vmem:[%s1369] sm:$0x1f]
    %v1371 = vadd.f32 %v1370, %v1360
    %1372 = vst [vmem:[%s1369] sm:$0x1f] %v1371
  $region29: #{bridge_structure_loss.1} parent=0 // pred_fallthru
    _
  // Predicated region
  $region30: #{bridge_structure_loss.1} parent=0 // pred_check
    _
  $region31: #{bridge_structure_loss.1} parent=0 // pred_check_branch
    %1374 = sbr.rel (0) target = $region33
  $region32: #{bridge_structure_loss.1} parent=0 // pred_region
    _
  $region33: #{bridge_structure_loss.1} parent=0 // pred_fallthru
    _
  // Predicated region
  $region34: #{bridge_structure_loss.1} parent=0 // pred_check
    _
  $region35: #{bridge_structure_loss.1} parent=0 // pred_check_branch
    %1376 = sbr.rel (0) target = $region37
  $region36: #{bridge_structure_loss.1} parent=0 // pred_region
    _
  $region37: #{bridge_structure_loss.1} parent=0 // pred_fallthru
    _

</llo_original>
